<compile_context>
chip_gen: v6e
topology: v6e:2x2x1
jax: 0.10.0
libtpu: 0.0.40
codegen_flags: <defaults>
</compile_context>

<pallas_src>
import jax
import jax.numpy as jnp
from jax.experimental import pallas as pl
from jax.experimental.pallas import tpu as pltpu

# --- synthetic hyper-parameters implied by the module's __init__ -------------
NUM_LANGS   = 10          # len(self.all_langs)
N2V_DIM     = 16          # args.lgcn_n2v_dim
NUM_PHONES  = 32          # len(self.glotto_all_phonemes)
INPUT_DIM   = N2V_DIM + NUM_PHONES   # lang_emb_type == 'all'
HIDDEN_DIM  = [32, 32]    # args.lgcn_hidden_dim
OUTPUT_DIM  = 32          # args.lgcn_output_dim
NUM_LAYER   = 2           # args.lgcn_num_layer  (== len(HIDDEN_DIM))

LANE = 128                # lane width of the packed parameter slab
_HIGHEST = jax.lax.Precision.HIGHEST


def _pad_rows(n):
    """Round a row count up to the sublane multiple (8)."""
    return -(-n // 8) * 8


def pack_params(embedding, weights, biases):
    """Pack embedding table + all Linear weights/biases into one f32 slab.

    Done ONCE at parameter-preparation time.  Every segment is (rows, 128)
    with rows a multiple of 8; weight segments are padded to 128 rows so the
    in-kernel dots are (Bp,128)@(128,128) with zero-padded (exact) extras.
    Returns (slab, layout) where layout holds static row offsets.
    """
    num_langs, input_dim = embedding.shape
    assert input_dim <= LANE
    for w in weights:
        assert w.shape[0] <= LANE and w.shape[1] <= LANE

    segs = []
    row = 0

    def add(pad_r, arr):
        nonlocal row
        r, c = arr.shape
        buf = jnp.zeros((pad_r, LANE), jnp.float32).at[:r, :c].set(
            arr.astype(jnp.float32))
        start = row
        segs.append(buf)
        row += pad_r
        return start

    emb_rows = _pad_rows(num_langs)
    emb_off = add(emb_rows, embedding)

    lin = []
    for w, b in zip(weights, biases):
        w_off = add(LANE, w)                       # (in_d, out_d) in a 128x128
        b_off = add(8, b.reshape(1, -1))           # bias row in an 8x128 block
        lin.append((w_off, b_off))

    slab = jnp.concatenate(segs, axis=0)           # (424, 128) f32, ~212 KiB
    layout = {"emb": (emb_off, emb_rows), "linear": tuple(lin)}
    return slab, layout


def _make_kernel(batch_pad, layout):
    """Kernel body: fused one-hot gather + MLP, everything 128-lane aligned."""
    emb_off, emb_rows = layout["emb"]
    lin = layout["linear"]
    n_lin = len(lin)

    def kernel(ids_ref, slab_ref, out_ref):
        # Fused embedding gather: one_hot(Bp, Lp) @ table(Lp, 128) on the MXU.
        # Precision.HIGHEST -> full-f32 contraction -> exact row gather.
        ids = ids_ref[...]                                           # (Bp, 1)
        iota = jax.lax.broadcasted_iota(jnp.int32, (batch_pad, emb_rows), 1)
        onehot = (ids == iota).astype(jnp.float32)                   # (Bp, Lp)
        table = slab_ref[emb_off:emb_off + emb_rows, :]              # (Lp, 128)
        h = jnp.dot(onehot, table, precision=_HIGHEST,
                    preferred_element_type=jnp.float32)              # (Bp, 128)

        for i, (w_off, b_off) in enumerate(lin):
            w = slab_ref[w_off:w_off + LANE, :]                      # (128, 128)
            b = slab_ref[b_off:b_off + 1, :]                         # (1, 128)
            h = jnp.dot(h, w, precision=_HIGHEST,
                        preferred_element_type=jnp.float32) + b
            if i < n_lin - 1:
                h = jnp.maximum(h, 0.0)   # F.relu; F.dropout(eval) == identity
        out_ref[...] = h

    return kernel


def build_lang_emb_forward(layout, batch, out_dim):
    """Build the pallas_call callable ONCE and return a jitted forward fn."""
    batch_pad = _pad_rows(batch)
    kernel = _make_kernel(batch_pad, layout)

    call = pl.pallas_call(
        kernel,
        out_shape=jax.ShapeDtypeStruct((batch_pad, LANE), jnp.float32),
        in_specs=[pl.BlockSpec(memory_space=pltpu.MemorySpace.VMEM),   # ids
                  pl.BlockSpec(memory_space=pltpu.MemorySpace.VMEM)],  # slab
        out_specs=pl.BlockSpec(memory_space=pltpu.MemorySpace.VMEM),
        # Footprint guard only: slab + buffers are well under 1 MiB.
        compiler_params=pltpu.CompilerParams(vmem_limit_bytes=4 * 1024 * 1024),
    )

    @jax.jit
    def forward(lang_ids, slab):
        ids = lang_ids.astype(jnp.int32)
        ids = jnp.pad(ids, (0, batch_pad - batch)).reshape(batch_pad, 1)
        out = call(ids, slab)                      # (Bp, 128) lane-dense store
        return out[:batch, :out_dim]

    return forward


def _init_params(key):
    """Deterministic synthetic parameters (no checkpoint / JSON load)."""
    dim_list = [INPUT_DIM] + HIDDEN_DIM + [OUTPUT_DIM]

    k_emb, k_ph, key = jax.random.split(key, 3)
    n2v = jax.random.normal(k_emb, (NUM_LANGS, N2V_DIM), jnp.float32)
    ph = (jax.random.uniform(k_ph, (NUM_LANGS, NUM_PHONES)) < 0.3
          ).astype(jnp.float32)                      # binary phoneme features
    embedding = jnp.concatenate([n2v, ph], axis=1)   # lang_emb_type == 'all'

    weights, biases = [], []
    for tt in range(NUM_LAYER):                      # hidden Linear layers
        kw, kb, key = jax.random.split(key, 3)
        scale = 1.0 / jnp.sqrt(dim_list[tt])
        weights.append(jax.random.uniform(
            kw, (dim_list[tt], dim_list[tt + 1]), jnp.float32, -scale, scale))
        biases.append(jax.random.uniform(
            kb, (1, dim_list[tt + 1]), jnp.float32, -scale, scale))
    kw, kb, key = jax.random.split(key, 3)           # final_linear
    scale = 1.0 / jnp.sqrt(dim_list[-2])
    weights.append(jax.random.uniform(
        kw, (dim_list[-2], dim_list[-1]), jnp.float32, -scale, scale))
    biases.append(jax.random.uniform(
        kb, (1, dim_list[-1]), jnp.float32, -scale, scale))
    return embedding, weights, biases


def _reference_forward(lang_ids, embedding, weights, biases):
    """Pure-JAX reference (mirrors the PyTorch forward at eval time)."""
    state = embedding[lang_ids]
    for tt in range(NUM_LAYER):
        state = jnp.maximum(
            jnp.dot(state, weights[tt], precision=_HIGHEST) + biases[tt], 0.0)
    return jnp.dot(state, weights[-1], precision=_HIGHEST) + biases[-1]


if __name__ == "__main__":
    key = jax.random.PRNGKey(0)
    embedding, weights, biases = _init_params(key)

    # One-time host-side packing + one-time kernel construction (amortized).
    slab, layout = pack_params(embedding, weights, biases)

    # `langs` list -> lang_ids (the string->index lookup is host-side glue).
    lang_ids = jnp.array([0, 3, 7, 2, 9, 5], dtype=jnp.int32)   # batch of 6

    forward = build_lang_emb_forward(layout, batch=lang_ids.shape[0],
                                     out_dim=OUTPUT_DIM)

    out = jax.block_until_ready(forward(lang_ids, slab))

    ref = _reference_forward(lang_ids, embedding, weights, biases)
    assert out.shape == (lang_ids.shape[0], OUTPUT_DIM)
    assert jnp.allclose(out, ref, rtol=1e-5, atol=1e-5), "mismatch vs reference"

    print("KERNEL_OK")
</pallas_src>

<mosaic_0001>
module attributes {stable_mosaic.version = 11 : i64} {
  func.func @kernel(%arg0: memref<8x1xi32, #tpu.memory_space<vmem>>, %arg1: memref<424x128xf32, #tpu.memory_space<vmem>>, %arg2: memref<8x128xf32, #tpu.memory_space<vmem>>) attributes {dimension_semantics = [], scalar_prefetch = 0 : i64, scratch_operands = 0 : i64, tpu.core_type = #tpu.core_type<tc>} {
    %c0 = arith.constant 0 : index
    %c0_0 = arith.constant 0 : index
    %0 = vector.load %arg0[%c0, %c0_0] : memref<8x1xi32, #tpu.memory_space<vmem>>, vector<8x1xi32>
    %1 = tpu.iota {dimensions = array<i32: 1>} : vector<8x16xi32>
    %2 = vector.broadcast %0 : vector<8x1xi32> to vector<8x16xi32>
    %3 = arith.cmpi eq, %2, %1 : vector<8x16xi32>
    %4 = arith.extui %3 : vector<8x16xi1> to vector<8x16xi32>
    %5 = arith.sitofp %4 : vector<8x16xi32> to vector<8x16xf32>
    %c0_1 = arith.constant 0 : index
    %c0_2 = arith.constant 0 : index
    %6 = vector.load %arg1[%c0_1, %c0_2] : memref<424x128xf32, #tpu.memory_space<vmem>>, vector<16x128xf32>
    %cst = arith.constant dense<0.000000e+00> : vector<8x128xf32>
    %7 = tpu.matmul %5, %6, %cst {dimension_numbers = #tpu.dot_dimension_numbers<[1], [0], [0], [1], [0, 0, 1, 1], [], []>, precision = #tpu.contract_precision<fp32>} : vector<8x16xf32>, vector<16x128xf32>, vector<8x128xf32> -> vector<8x128xf32>
    %c16 = arith.constant 16 : index
    %c0_3 = arith.constant 0 : index
    %8 = vector.load %arg1[%c16, %c0_3] : memref<424x128xf32, #tpu.memory_space<vmem>>, vector<128x128xf32>
    %c144 = arith.constant 144 : index
    %c0_4 = arith.constant 0 : index
    %9 = vector.load %arg1[%c144, %c0_4] : memref<424x128xf32, #tpu.memory_space<vmem>>, vector<1x128xf32>
    %cst_5 = arith.constant dense<0.000000e+00> : vector<8x128xf32>
    %10 = tpu.matmul %7, %8, %cst_5 {dimension_numbers = #tpu.dot_dimension_numbers<[1], [0], [0], [1], [0, 0, 1, 1], [], []>, precision = #tpu.contract_precision<fp32>} : vector<8x128xf32>, vector<128x128xf32>, vector<8x128xf32> -> vector<8x128xf32>
    %11 = vector.broadcast %9 : vector<1x128xf32> to vector<8x128xf32>
    %12 = arith.addf %10, %11 : vector<8x128xf32>
    %cst_6 = arith.constant 0.000000e+00 : f32
    %13 = vector.broadcast %cst_6 : f32 to vector<8x128xf32>
    %14 = arith.maximumf %12, %13 : vector<8x128xf32>
    %c152 = arith.constant 152 : index
    %c0_7 = arith.constant 0 : index
    %15 = vector.load %arg1[%c152, %c0_7] : memref<424x128xf32, #tpu.memory_space<vmem>>, vector<128x128xf32>
    %c280 = arith.constant 280 : index
    %c0_8 = arith.constant 0 : index
    %16 = vector.load %arg1[%c280, %c0_8] : memref<424x128xf32, #tpu.memory_space<vmem>>, vector<1x128xf32>
    %cst_9 = arith.constant dense<0.000000e+00> : vector<8x128xf32>
    %17 = tpu.matmul %14, %15, %cst_9 {dimension_numbers = #tpu.dot_dimension_numbers<[1], [0], [0], [1], [0, 0, 1, 1], [], []>, precision = #tpu.contract_precision<fp32>} : vector<8x128xf32>, vector<128x128xf32>, vector<8x128xf32> -> vector<8x128xf32>
    %18 = vector.broadcast %16 : vector<1x128xf32> to vector<8x128xf32>
    %19 = arith.addf %17, %18 : vector<8x128xf32>
    %cst_10 = arith.constant 0.000000e+00 : f32
    %20 = vector.broadcast %cst_10 : f32 to vector<8x128xf32>
    %21 = arith.maximumf %19, %20 : vector<8x128xf32>
    %c288 = arith.constant 288 : index
    %c0_11 = arith.constant 0 : index
    %22 = vector.load %arg1[%c288, %c0_11] : memref<424x128xf32, #tpu.memory_space<vmem>>, vector<128x128xf32>
    %c416 = arith.constant 416 : index
    %c0_12 = arith.constant 0 : index
    %23 = vector.load %arg1[%c416, %c0_12] : memref<424x128xf32, #tpu.memory_space<vmem>>, vector<1x128xf32>
    %cst_13 = arith.constant dense<0.000000e+00> : vector<8x128xf32>
    %24 = tpu.matmul %21, %22, %cst_13 {dimension_numbers = #tpu.dot_dimension_numbers<[1], [0], [0], [1], [0, 0, 1, 1], [], []>, precision = #tpu.contract_precision<fp32>} : vector<8x128xf32>, vector<128x128xf32>, vector<8x128xf32> -> vector<8x128xf32>
    %25 = vector.broadcast %23 : vector<1x128xf32> to vector<8x128xf32>
    %26 = arith.addf %24, %25 : vector<8x128xf32>
    %c0_14 = arith.constant 0 : index
    %c0_15 = arith.constant 0 : index
    %27 = vector.load %arg2[%c0_14, %c0_15] : memref<8x128xf32, #tpu.memory_space<vmem>>, vector<8x128xf32>
    tpu.vector_store %arg2[%c0_14, %c0_15], %26 {strides = array<i32>} : memref<8x128xf32, #tpu.memory_space<vmem>>, vector<8x128xf32>,
    return
  }
}

</mosaic_0001>

<llo_original>
// kernel: forward.1
$region0: #{forward.1}
  #allocation0 [shape = 'u32[]', space=smem, size = 0x4, offset = 0x4, fixed_abs, tag = 'smem constant byte address 0x4 - core index']
  #allocation1 [shape = 'u32[144,128]{1,0:T(1,128)}', space=vmem, size = 0x12000, scoped, tag = 'internal scratch']
  %s0 = inlined_call_operand.vmem [shape: s32[8,1], index: 0, kind: input, shape index: {}]
  %s1 = inlined_call_operand.hbm [shape: f32[424,128], index: 1, kind: input, shape index: {}]
  %s2 = inlined_call_operand.hbm [shape: f32[8,128], index: 2, kind: output, shape index: {}]
  %s3 = sld [smem:[#allocation0]]
  $region22: #{forward.1} parent=0
    _
  %s5 = ssub.s32 1, %s3
  %s6 = scalar_select 0, %s5, %s3
  $region1: #{forward.1} parent=0
    #allocation2 [shape = 'u8[217088]{0}', space=vmem, size = 0x35000, scoped, tag = 'input window, operand 1, single buffered']
    #allocation3 [shape = 's32[1]{0}', space=sflag, size = 0x4, scoped, tag = 'scoped memory for forward.1']
    #allocation4 [shape = 's32[1]{0}', space=sflag, size = 0x4, scoped, tag = 'scoped memory for forward.1']
    #allocation5 [shape = 'u8[4096]{0}', space=vmem, size = 0x1000, scoped, tag = 'output window, operand 0, single buffered']
    %7 = vsyncpa [#allocation3], 0
    %8 = vsyncpa [#allocation4], 0
    // Predicated region
    $region2: #{forward.1} parent=1 // pred_check
      _
    $region3: #{forward.1} parent=1 // pred_check_branch
      %10 = sbr.rel (0) target = $region5
    $region4: #{forward.1} parent=1 // pred_region
      _
    $region5: #{forward.1} parent=1 // pred_fallthru
      _
    // Predicated region
    $region6: #{forward.1} parent=1 // pred_check
      _
    $region7: #{forward.1} parent=1 // pred_check_branch
      %12 = sbr.rel (0) target = $region9
    $region8: #{forward.1} parent=1 // pred_region
      %s14 = ssub.s32 6784, 6784
      %15 = vsyncadd [#allocation3], %s14
      %s16 = sshll.u32 [#allocation2], 4
      %s17 = int_to_ptr.vmem [resolvable:$true] %s16
      %22 = dma.hbm_to_vmem [thread:$0]  %s1, 6784, %s17, [#allocation3], 128, 128, 8
    $region9: #{forward.1} parent=1 // pred_fallthru
      _
    // Predicated region
    $region10: #{forward.1} parent=1 // pred_check
      _
    $region11: #{forward.1} parent=1 // pred_check_branch
      %24 = sbr.rel (0) target = $region13
    $region12: #{forward.1} parent=1 // pred_region
      %25 = dma.done [#allocation3], 6784
    $region13: #{forward.1} parent=1 // pred_fallthru
      _
    %v26 = vld [vmem:[%s0] sm:$0xff]
    %v27 = vlaneseq
    %v28 = vand.u32 %v27, 127
    %29 = vset.pattern.permute.xlu0 0
    %30 = vperm.xlu0 %29, %v26
    %v31 = vpop.permute.xlu0 %30
    %vm32 = vcmp.eq.s32.totalorder %v31, %v28
    %v33 = vsel %vm32, 1, 0
    %v34 = vcvt.s32.f32 %v33
    %v35 = vld [vmem:[#allocation2] sm:$0xff]
    %v36 = vld [vmem:[#allocation2 + $0x8] sm:$0xff]
    %vm37 = vcmask 130048
    %v39 = vsel %vm37, %v34, 0
    %41 = vmatprep.subr.mxu0 0.0
    %42 = vmatpush1.msra.mxu0 0.0
    %43 = vmatprep.subr.mxu0 0.0
    %44 = vmatpush1.msra.mxu0 0.0
    %45 = vmatprep.subr.mxu0 0.0
    %46 = vmatpush1.msra.mxu0 0.0
    %47 = vmatprep.subr.mxu0 0.0
    %48 = vmatpush1.msra.mxu0 0.0
    %49 = vmatprep.subr.mxu0 0.0
    %50 = vmatpush1.msra.mxu0 0.0
    %51 = vmatprep.subr.mxu0 0.0
    %52 = vmatpush1.msra.mxu0 0.0
    %53 = vmatprep.subr.mxu0 0.0
    %54 = vmatpush1.msra.mxu0 0.0
    %55 = vmatprep.subr.mxu0 0.0
    %56 = vmatpush1.msra.mxu0 0.0
    %57 = vmatprep.subr.mxu0 0.0
    %58 = vmatpush1.msra.mxu0 0.0
    %59 = vmatprep.subr.mxu0 0.0
    %60 = vmatpush1.msra.mxu0 0.0
    %61 = vmatprep.subr.mxu0 0.0
    %62 = vmatpush1.msra.mxu0 0.0
    %63 = vmatprep.subr.mxu0 0.0
    %64 = vmatpush1.msra.mxu0 0.0
    %65 = vmatprep.subr.mxu0 0.0
    %66 = vmatpush1.msra.mxu0 0.0
    %67 = vmatprep.subr.mxu0 0.0
    %68 = vmatpush1.msra.mxu0 0.0
    %69 = vmatprep.subr.mxu0 0.0
    %v70 = vand.u32 %v36, 4294901760
    %71 = vmatpush1.msra.mxu0 %v70
    %72 = vmatprep.subr.mxu0 0.0
    %v73 = vand.u32 %v35, 4294901760
    %74 = vmatpush1.msra.mxu0 %v73
    %75 = vmatprep.subr.mxu0 0.0
    %76 = vmatpush2.msra.mxu0 0.0
    %77 = vmatprep.subr.mxu0 0.0
    %78 = vmatpush2.msra.mxu0 0.0
    %79 = vmatprep.subr.mxu0 0.0
    %80 = vmatpush2.msra.mxu0 0.0
    %81 = vmatprep.subr.mxu0 0.0
    %82 = vmatpush2.msra.mxu0 0.0
    %83 = vmatprep.subr.mxu0 0.0
    %84 = vmatpush2.msra.mxu0 0.0
    %85 = vmatprep.subr.mxu0 0.0
    %86 = vmatpush2.msra.mxu0 0.0
    %87 = vmatprep.subr.mxu0 0.0
    %88 = vmatpush2.msra.mxu0 0.0
    %89 = vmatprep.subr.mxu0 0.0
    %90 = vmatpush2.msra.mxu0 0.0
    %91 = vmatprep.subr.mxu0 0.0
    %92 = vmatpush2.msra.mxu0 0.0
    %93 = vmatprep.subr.mxu0 0.0
    %94 = vmatpush2.msra.mxu0 0.0
    %95 = vmatprep.subr.mxu0 0.0
    %96 = vmatpush2.msra.mxu0 0.0
    %97 = vmatprep.subr.mxu0 0.0
    %98 = vmatpush2.msra.mxu0 0.0
    %99 = vmatprep.subr.mxu0 0.0
    %100 = vmatpush2.msra.mxu0 0.0
    %101 = vmatprep.subr.mxu0 0.0
    %102 = vmatpush2.msra.mxu0 0.0
    %103 = vmatprep.subr.mxu0 0.0
    %104 = vmatpush2.msra.mxu0 0.0
    %105 = vmatprep.subr.mxu0 0.0
    %106 = vmatpush2.msra.mxu0 0.0
    %107 = vmatprep.mubr.f32.mxu0 0.0
    %v108 = vand.u32 %v39, 4294901760
    %v109 = vsub.f32 %v39, %v108
    %v110 = vand.u32 %v109, 4294901760
    %v111 = vsub.f32 %v109, %v110
    %v112 = vand.u32 %v111, 4294901760
    %113 = vmatmul.mubr.f32.gmra.mxu0 %v112
    %v114 = vpop.f32.mrf.mxu0
    %v115 = vadd.f32 0.0, %v114
    %v116 = vpop.f32.mrf.mxu0
    %117 = vdwg.mxu0
    %118 = vmatprep.subr.mxu0 0.0
    %119 = vmatpush1.msra.mxu0 0.0
    %120 = vmatprep.subr.mxu0 0.0
    %121 = vmatpush1.msra.mxu0 0.0
    %122 = vmatprep.subr.mxu0 0.0
    %123 = vmatpush1.msra.mxu0 0.0
    %124 = vmatprep.subr.mxu0 0.0
    %125 = vmatpush1.msra.mxu0 0.0
    %126 = vmatprep.subr.mxu0 0.0
    %127 = vmatpush1.msra.mxu0 0.0
    %128 = vmatprep.subr.mxu0 0.0
    %129 = vmatpush1.msra.mxu0 0.0
    %130 = vmatprep.subr.mxu0 0.0
    %131 = vmatpush1.msra.mxu0 0.0
    %132 = vmatprep.subr.mxu0 0.0
    %133 = vmatpush1.msra.mxu0 0.0
    %134 = vmatprep.subr.mxu0 0.0
    %135 = vmatpush1.msra.mxu0 0.0
    %136 = vmatprep.subr.mxu0 0.0
    %137 = vmatpush1.msra.mxu0 0.0
    %138 = vmatprep.subr.mxu0 0.0
    %139 = vmatpush1.msra.mxu0 0.0
    %140 = vmatprep.subr.mxu0 0.0
    %141 = vmatpush1.msra.mxu0 0.0
    %142 = vmatprep.subr.mxu0 0.0
    %143 = vmatpush1.msra.mxu0 0.0
    %144 = vmatprep.subr.mxu0 0.0
    %145 = vmatpush1.msra.mxu0 0.0
    %146 = vmatprep.subr.mxu0 0.0
    %v147 = vand.u32 %v36, 4294901760
    %v148 = vsub.f32 %v36, %v147
    %v149 = vand.u32 %v148, 4294901760
    %v150 = vsub.f32 %v148, %v149
    %v151 = vand.u32 %v150, 4294901760
    %152 = vmatpush1.msra.mxu0 %v151
    %153 = vmatprep.subr.mxu0 0.0
    %v154 = vand.u32 %v35, 4294901760
    %v155 = vsub.f32 %v35, %v154
    %v156 = vand.u32 %v155, 4294901760
    %v157 = vsub.f32 %v155, %v156
    %v158 = vand.u32 %v157, 4294901760
    %159 = vmatpush1.msra.mxu0 %v158
    %160 = vmatprep.subr.mxu0 0.0
    %161 = vmatpush2.msra.mxu0 0.0
    %162 = vmatprep.subr.mxu0 0.0
    %163 = vmatpush2.msra.mxu0 0.0
    %164 = vmatprep.subr.mxu0 0.0
    %165 = vmatpush2.msra.mxu0 0.0
    %166 = vmatprep.subr.mxu0 0.0
    %167 = vmatpush2.msra.mxu0 0.0
    %168 = vmatprep.subr.mxu0 0.0
    %169 = vmatpush2.msra.mxu0 0.0
    %170 = vmatprep.subr.mxu0 0.0
    %171 = vmatpush2.msra.mxu0 0.0
    %172 = vmatprep.subr.mxu0 0.0
    %173 = vmatpush2.msra.mxu0 0.0
    %174 = vmatprep.subr.mxu0 0.0
    %175 = vmatpush2.msra.mxu0 0.0
    %176 = vmatprep.subr.mxu0 0.0
    %177 = vmatpush2.msra.mxu0 0.0
    %178 = vmatprep.subr.mxu0 0.0
    %179 = vmatpush2.msra.mxu0 0.0
    %180 = vmatprep.subr.mxu0 0.0
    %181 = vmatpush2.msra.mxu0 0.0
    %182 = vmatprep.subr.mxu0 0.0
    %183 = vmatpush2.msra.mxu0 0.0
    %184 = vmatprep.subr.mxu0 0.0
    %185 = vmatpush2.msra.mxu0 0.0
    %186 = vmatprep.subr.mxu0 0.0
    %187 = vmatpush2.msra.mxu0 0.0
    %188 = vmatprep.subr.mxu0 0.0
    %189 = vmatpush2.msra.mxu0 0.0
    %190 = vmatprep.subr.mxu0 0.0
    %191 = vmatpush2.msra.mxu0 0.0
    %192 = vmatprep.mubr.f32.mxu0 0.0
    %v193 = vand.u32 %v39, 4294901760
    %194 = vmatmul.mubr.f32.gmra.mxu0 %v193
    %v195 = vpop.f32.mrf.mxu0
    %v196 = vadd.f32 %v115, %v195
    %v197 = vpop.f32.mrf.mxu0
    %198 = vdwg.mxu0
    %199 = vmatprep.subr.mxu0 0.0
    %200 = vmatpush1.msra.mxu0 0.0
    %201 = vmatprep.subr.mxu0 0.0
    %202 = vmatpush1.msra.mxu0 0.0
    %203 = vmatprep.subr.mxu0 0.0
    %204 = vmatpush1.msra.mxu0 0.0
    %205 = vmatprep.subr.mxu0 0.0
    %206 = vmatpush1.msra.mxu0 0.0
    %207 = vmatprep.subr.mxu0 0.0
    %208 = vmatpush1.msra.mxu0 0.0
    %209 = vmatprep.subr.mxu0 0.0
    %210 = vmatpush1.msra.mxu0 0.0
    %211 = vmatprep.subr.mxu0 0.0
    %212 = vmatpush1.msra.mxu0 0.0
    %213 = vmatprep.subr.mxu0 0.0
    %214 = vmatpush1.msra.mxu0 0.0
    %215 = vmatprep.subr.mxu0 0.0
    %216 = vmatpush1.msra.mxu0 0.0
    %217 = vmatprep.subr.mxu0 0.0
    %218 = vmatpush1.msra.mxu0 0.0
    %219 = vmatprep.subr.mxu0 0.0
    %220 = vmatpush1.msra.mxu0 0.0
    %221 = vmatprep.subr.mxu0 0.0
    %222 = vmatpush1.msra.mxu0 0.0
    %223 = vmatprep.subr.mxu0 0.0
    %224 = vmatpush1.msra.mxu0 0.0
    %225 = vmatprep.subr.mxu0 0.0
    %226 = vmatpush1.msra.mxu0 0.0
    %227 = vmatprep.subr.mxu0 0.0
    %v228 = vand.u32 %v36, 4294901760
    %v229 = vsub.f32 %v36, %v228
    %230 = vmatpush1.msra.mxu0 %v229
    %231 = vmatprep.subr.mxu0 0.0
    %v232 = vand.u32 %v35, 4294901760
    %v233 = vsub.f32 %v35, %v232
    %234 = vmatpush1.msra.mxu0 %v233
    %235 = vmatprep.subr.mxu0 0.0
    %236 = vmatpush2.msra.mxu0 0.0
    %237 = vmatprep.subr.mxu0 0.0
    %238 = vmatpush2.msra.mxu0 0.0
    %239 = vmatprep.subr.mxu0 0.0
    %240 = vmatpush2.msra.mxu0 0.0
    %241 = vmatprep.subr.mxu0 0.0
    %242 = vmatpush2.msra.mxu0 0.0
    %243 = vmatprep.subr.mxu0 0.0
    %244 = vmatpush2.msra.mxu0 0.0
    %245 = vmatprep.subr.mxu0 0.0
    %246 = vmatpush2.msra.mxu0 0.0
    %247 = vmatprep.subr.mxu0 0.0
    %248 = vmatpush2.msra.mxu0 0.0
    %249 = vmatprep.subr.mxu0 0.0
    %250 = vmatpush2.msra.mxu0 0.0
    %251 = vmatprep.subr.mxu0 0.0
    %252 = vmatpush2.msra.mxu0 0.0
    %253 = vmatprep.subr.mxu0 0.0
    %254 = vmatpush2.msra.mxu0 0.0
    %255 = vmatprep.subr.mxu0 0.0
    %256 = vmatpush2.msra.mxu0 0.0
    %257 = vmatprep.subr.mxu0 0.0
    %258 = vmatpush2.msra.mxu0 0.0
    %259 = vmatprep.subr.mxu0 0.0
    %260 = vmatpush2.msra.mxu0 0.0
    %261 = vmatprep.subr.mxu0 0.0
    %262 = vmatpush2.msra.mxu0 0.0
    %263 = vmatprep.subr.mxu0 0.0
    %264 = vmatpush2.msra.mxu0 0.0
    %265 = vmatprep.subr.mxu0 0.0
    %266 = vmatpush2.msra.mxu0 0.0
    %267 = vmatprep.mubr.f32.mxu0 0.0
    %v268 = vand.u32 %v39, 4294901760
    %v269 = vsub.f32 %v39, %v268
    %270 = vmatmul.mubr.f32.gmra.mxu0 %v269
    %v271 = vpop.f32.mrf.mxu0
    %v272 = vadd.f32 %v196, %v271
    %v273 = vpop.f32.mrf.mxu0
    %274 = vdwg.mxu0
    %275 = vmatprep.subr.mxu0 0.0
    %276 = vmatpush1.msra.mxu0 0.0
    %277 = vmatprep.subr.mxu0 0.0
    %278 = vmatpush1.msra.mxu0 0.0
    %279 = vmatprep.subr.mxu0 0.0
    %280 = vmatpush1.msra.mxu0 0.0
    %281 = vmatprep.subr.mxu0 0.0
    %282 = vmatpush1.msra.mxu0 0.0
    %283 = vmatprep.subr.mxu0 0.0
    %284 = vmatpush1.msra.mxu0 0.0
    %285 = vmatprep.subr.mxu0 0.0
    %286 = vmatpush1.msra.mxu0 0.0
    %287 = vmatprep.subr.mxu0 0.0
    %288 = vmatpush1.msra.mxu0 0.0
    %289 = vmatprep.subr.mxu0 0.0
    %290 = vmatpush1.msra.mxu0 0.0
    %291 = vmatprep.subr.mxu0 0.0
    %292 = vmatpush1.msra.mxu0 0.0
    %293 = vmatprep.subr.mxu0 0.0
    %294 = vmatpush1.msra.mxu0 0.0
    %295 = vmatprep.subr.mxu0 0.0
    %296 = vmatpush1.msra.mxu0 0.0
    %297 = vmatprep.subr.mxu0 0.0
    %298 = vmatpush1.msra.mxu0 0.0
    %299 = vmatprep.subr.mxu0 0.0
    %300 = vmatpush1.msra.mxu0 0.0
    %301 = vmatprep.subr.mxu0 0.0
    %302 = vmatpush1.msra.mxu0 0.0
    %303 = vmatprep.subr.mxu0 0.0
    %v304 = vand.u32 %v36, 4294901760
    %305 = vmatpush1.msra.mxu0 %v304
    %306 = vmatprep.subr.mxu0 0.0
    %v307 = vand.u32 %v35, 4294901760
    %308 = vmatpush1.msra.mxu0 %v307
    %309 = vmatprep.subr.mxu0 0.0
    %310 = vmatpush2.msra.mxu0 0.0
    %311 = vmatprep.subr.mxu0 0.0
    %312 = vmatpush2.msra.mxu0 0.0
    %313 = vmatprep.subr.mxu0 0.0
    %314 = vmatpush2.msra.mxu0 0.0
    %315 = vmatprep.subr.mxu0 0.0
    %316 = vmatpush2.msra.mxu0 0.0
    %317 = vmatprep.subr.mxu0 0.0
    %318 = vmatpush2.msra.mxu0 0.0
    %319 = vmatprep.subr.mxu0 0.0
    %320 = vmatpush2.msra.mxu0 0.0
    %321 = vmatprep.subr.mxu0 0.0
    %322 = vmatpush2.msra.mxu0 0.0
    %323 = vmatprep.subr.mxu0 0.0
    %324 = vmatpush2.msra.mxu0 0.0
    %325 = vmatprep.subr.mxu0 0.0
    %326 = vmatpush2.msra.mxu0 0.0
    %327 = vmatprep.subr.mxu0 0.0
    %328 = vmatpush2.msra.mxu0 0.0
    %329 = vmatprep.subr.mxu0 0.0
    %330 = vmatpush2.msra.mxu0 0.0
    %331 = vmatprep.subr.mxu0 0.0
    %332 = vmatpush2.msra.mxu0 0.0
    %333 = vmatprep.subr.mxu0 0.0
    %334 = vmatpush2.msra.mxu0 0.0
    %335 = vmatprep.subr.mxu0 0.0
    %336 = vmatpush2.msra.mxu0 0.0
    %337 = vmatprep.subr.mxu0 0.0
    %338 = vmatpush2.msra.mxu0 0.0
    %339 = vmatprep.subr.mxu0 0.0
    %340 = vmatpush2.msra.mxu0 0.0
    %341 = vmatprep.mubr.f32.mxu0 0.0
    %v342 = vand.u32 %v39, 4294901760
    %v343 = vsub.f32 %v39, %v342
    %v344 = vand.u32 %v343, 4294901760
    %345 = vmatmul.mubr.f32.gmra.mxu0 %v344
    %v346 = vpop.f32.mrf.mxu0
    %v347 = vadd.f32 %v272, %v346
    %v348 = vpop.f32.mrf.mxu0
    %349 = vdwg.mxu0
    %350 = vmatprep.subr.mxu0 0.0
    %351 = vmatpush1.msra.mxu0 0.0
    %352 = vmatprep.subr.mxu0 0.0
    %353 = vmatpush1.msra.mxu0 0.0
    %354 = vmatprep.subr.mxu0 0.0
    %355 = vmatpush1.msra.mxu0 0.0
    %356 = vmatprep.subr.mxu0 0.0
    %357 = vmatpush1.msra.mxu0 0.0
    %358 = vmatprep.subr.mxu0 0.0
    %359 = vmatpush1.msra.mxu0 0.0
    %360 = vmatprep.subr.mxu0 0.0
    %361 = vmatpush1.msra.mxu0 0.0
    %362 = vmatprep.subr.mxu0 0.0
    %363 = vmatpush1.msra.mxu0 0.0
    %364 = vmatprep.subr.mxu0 0.0
    %365 = vmatpush1.msra.mxu0 0.0
    %366 = vmatprep.subr.mxu0 0.0
    %367 = vmatpush1.msra.mxu0 0.0
    %368 = vmatprep.subr.mxu0 0.0
    %369 = vmatpush1.msra.mxu0 0.0
    %370 = vmatprep.subr.mxu0 0.0
    %371 = vmatpush1.msra.mxu0 0.0
    %372 = vmatprep.subr.mxu0 0.0
    %373 = vmatpush1.msra.mxu0 0.0
    %374 = vmatprep.subr.mxu0 0.0
    %375 = vmatpush1.msra.mxu0 0.0
    %376 = vmatprep.subr.mxu0 0.0
    %377 = vmatpush1.msra.mxu0 0.0
    %378 = vmatprep.subr.mxu0 0.0
    %v379 = vand.u32 %v36, 4294901760
    %v380 = vsub.f32 %v36, %v379
    %v381 = vand.u32 %v380, 4294901760
    %382 = vmatpush1.msra.mxu0 %v381
    %383 = vmatprep.subr.mxu0 0.0
    %v384 = vand.u32 %v35, 4294901760
    %v385 = vsub.f32 %v35, %v384
    %v386 = vand.u32 %v385, 4294901760
    %387 = vmatpush1.msra.mxu0 %v386
    %388 = vmatprep.subr.mxu0 0.0
    %389 = vmatpush2.msra.mxu0 0.0
    %390 = vmatprep.subr.mxu0 0.0
    %391 = vmatpush2.msra.mxu0 0.0
    %392 = vmatprep.subr.mxu0 0.0
    %393 = vmatpush2.msra.mxu0 0.0
    %394 = vmatprep.subr.mxu0 0.0
    %395 = vmatpush2.msra.mxu0 0.0
    %396 = vmatprep.subr.mxu0 0.0
    %397 = vmatpush2.msra.mxu0 0.0
    %398 = vmatprep.subr.mxu0 0.0
    %399 = vmatpush2.msra.mxu0 0.0
    %400 = vmatprep.subr.mxu0 0.0
    %401 = vmatpush2.msra.mxu0 0.0
    %402 = vmatprep.subr.mxu0 0.0
    %403 = vmatpush2.msra.mxu0 0.0
    %404 = vmatprep.subr.mxu0 0.0
    %405 = vmatpush2.msra.mxu0 0.0
    %406 = vmatprep.subr.mxu0 0.0
    %407 = vmatpush2.msra.mxu0 0.0
    %408 = vmatprep.subr.mxu0 0.0
    %409 = vmatpush2.msra.mxu0 0.0
    %410 = vmatprep.subr.mxu0 0.0
    %411 = vmatpush2.msra.mxu0 0.0
    %412 = vmatprep.subr.mxu0 0.0
    %413 = vmatpush2.msra.mxu0 0.0
    %414 = vmatprep.subr.mxu0 0.0
    %415 = vmatpush2.msra.mxu0 0.0
    %416 = vmatprep.subr.mxu0 0.0
    %417 = vmatpush2.msra.mxu0 0.0
    %418 = vmatprep.subr.mxu0 0.0
    %419 = vmatpush2.msra.mxu0 0.0
    %420 = vmatprep.mubr.f32.mxu0 0.0
    %v421 = vand.u32 %v39, 4294901760
    %422 = vmatmul.mubr.f32.gmra.mxu0 %v421
    %v423 = vpop.f32.mrf.mxu0
    %v424 = vadd.f32 %v347, %v423
    %v425 = vpop.f32.mrf.mxu0
    %426 = vdwg.mxu0
    %427 = vmatprep.subr.mxu0 0.0
    %428 = vmatpush1.msra.mxu0 0.0
    %429 = vmatprep.subr.mxu0 0.0
    %430 = vmatpush1.msra.mxu0 0.0
    %431 = vmatprep.subr.mxu0 0.0
    %432 = vmatpush1.msra.mxu0 0.0
    %433 = vmatprep.subr.mxu0 0.0
    %434 = vmatpush1.msra.mxu0 0.0
    %435 = vmatprep.subr.mxu0 0.0
    %436 = vmatpush1.msra.mxu0 0.0
    %437 = vmatprep.subr.mxu0 0.0
    %438 = vmatpush1.msra.mxu0 0.0
    %439 = vmatprep.subr.mxu0 0.0
    %440 = vmatpush1.msra.mxu0 0.0
    %441 = vmatprep.subr.mxu0 0.0
    %442 = vmatpush1.msra.mxu0 0.0
    %443 = vmatprep.subr.mxu0 0.0
    %444 = vmatpush1.msra.mxu0 0.0
    %445 = vmatprep.subr.mxu0 0.0
    %446 = vmatpush1.msra.mxu0 0.0
    %447 = vmatprep.subr.mxu0 0.0
    %448 = vmatpush1.msra.mxu0 0.0
    %449 = vmatprep.subr.mxu0 0.0
    %450 = vmatpush1.msra.mxu0 0.0
    %451 = vmatprep.subr.mxu0 0.0
    %452 = vmatpush1.msra.mxu0 0.0
    %453 = vmatprep.subr.mxu0 0.0
    %454 = vmatpush1.msra.mxu0 0.0
    %455 = vmatprep.subr.mxu0 0.0
    %v456 = vand.u32 %v36, 4294901760
    %457 = vmatpush1.msra.mxu0 %v456
    %458 = vmatprep.subr.mxu0 0.0
    %v459 = vand.u32 %v35, 4294901760
    %460 = vmatpush1.msra.mxu0 %v459
    %461 = vmatprep.subr.mxu0 0.0
    %462 = vmatpush2.msra.mxu0 0.0
    %463 = vmatprep.subr.mxu0 0.0
    %464 = vmatpush2.msra.mxu0 0.0
    %465 = vmatprep.subr.mxu0 0.0
    %466 = vmatpush2.msra.mxu0 0.0
    %467 = vmatprep.subr.mxu0 0.0
    %468 = vmatpush2.msra.mxu0 0.0
    %469 = vmatprep.subr.mxu0 0.0
    %470 = vmatpush2.msra.mxu0 0.0
    %471 = vmatprep.subr.mxu0 0.0
    %472 = vmatpush2.msra.mxu0 0.0
    %473 = vmatprep.subr.mxu0 0.0
    %474 = vmatpush2.msra.mxu0 0.0
    %475 = vmatprep.subr.mxu0 0.0
    %476 = vmatpush2.msra.mxu0 0.0
    %477 = vmatprep.subr.mxu0 0.0
    %478 = vmatpush2.msra.mxu0 0.0
    %479 = vmatprep.subr.mxu0 0.0
    %480 = vmatpush2.msra.mxu0 0.0
    %481 = vmatprep.subr.mxu0 0.0
    %482 = vmatpush2.msra.mxu0 0.0
    %483 = vmatprep.subr.mxu0 0.0
    %484 = vmatpush2.msra.mxu0 0.0
    %485 = vmatprep.subr.mxu0 0.0
    %486 = vmatpush2.msra.mxu0 0.0
    %487 = vmatprep.subr.mxu0 0.0
    %488 = vmatpush2.msra.mxu0 0.0
    %489 = vmatprep.subr.mxu0 0.0
    %490 = vmatpush2.msra.mxu0 0.0
    %491 = vmatprep.subr.mxu0 0.0
    %492 = vmatpush2.msra.mxu0 0.0
    %493 = vmatprep.mubr.f32.mxu0 0.0
    %v494 = vand.u32 %v39, 4294901760
    %495 = vmatmul.mubr.f32.gmra.mxu0 %v494
    %v496 = vpop.f32.mrf.mxu0
    %v497 = vadd.f32 %v424, %v496
    %v498 = vpop.f32.mrf.mxu0
    %499 = vdwg.mxu0
    %v500 = vld [vmem:[#allocation2 + $0x10] sm:$0xff]
    %v501 = vld [vmem:[#allocation2 + $0x18] sm:$0xff]
    %v502 = vld [vmem:[#allocation2 + $0x20] sm:$0xff]
    %v503 = vld [vmem:[#allocation2 + $0x28] sm:$0xff]
    %v504 = vld [vmem:[#allocation2 + $0x30] sm:$0xff]
    %v505 = vld [vmem:[#allocation2 + $0x38] sm:$0xff]
    %v506 = vld [vmem:[#allocation2 + $0x40] sm:$0xff]
    %v507 = vld [vmem:[#allocation2 + $0x48] sm:$0xff]
    %v508 = vld [vmem:[#allocation2 + $0x50] sm:$0xff]
    %v509 = vld [vmem:[#allocation2 + $0x58] sm:$0xff]
    %v510 = vld [vmem:[#allocation2 + $0x60] sm:$0xff]
    %v511 = vld [vmem:[#allocation2 + $0x68] sm:$0xff]
    %v512 = vld [vmem:[#allocation2 + $0x70] sm:$0xff]
    %v513 = vld [vmem:[#allocation2 + $0x78] sm:$0xff]
    %v514 = vld [vmem:[#allocation2 + $0x80] sm:$0xff]
    %v515 = vld [vmem:[#allocation2 + $0x88] sm:$0xff]
    %v516 = vld [vmem:[#allocation2 + $0x90] sm:$0x1]
    %v517 = vlaneseq
    %v518 = vshrl.u32 %v517, 7
    %v519 = vsub.s32 0, %v518
    %v520 = vrot.slane %v516, %v519
    %521 = vmatprep.subr.mxu0 0.0
    %v522 = vand.u32 %v515, 4294901760
    %523 = vmatpush1.msra.mxu0 %v522
    %524 = vmatprep.subr.mxu0 0.0
    %v525 = vand.u32 %v514, 4294901760
    %526 = vmatpush1.msra.mxu0 %v525
    %527 = vmatprep.subr.mxu0 0.0
    %v528 = vand.u32 %v513, 4294901760
    %529 = vmatpush1.msra.mxu0 %v528
    %530 = vmatprep.subr.mxu0 0.0
    %v531 = vand.u32 %v512, 4294901760
    %532 = vmatpush1.msra.mxu0 %v531
    %533 = vmatprep.subr.mxu0 0.0
    %v534 = vand.u32 %v511, 4294901760
    %535 = vmatpush1.msra.mxu0 %v534
    %536 = vmatprep.subr.mxu0 0.0
    %v537 = vand.u32 %v510, 4294901760
    %538 = vmatpush1.msra.mxu0 %v537
    %539 = vmatprep.subr.mxu0 0.0
    %v540 = vand.u32 %v509, 4294901760
    %541 = vmatpush1.msra.mxu0 %v540
    %542 = vmatprep.subr.mxu0 0.0
    %v543 = vand.u32 %v508, 4294901760
    %544 = vmatpush1.msra.mxu0 %v543
    %545 = vmatprep.subr.mxu0 0.0
    %v546 = vand.u32 %v507, 4294901760
    %547 = vmatpush1.msra.mxu0 %v546
    %548 = vmatprep.subr.mxu0 0.0
    %v549 = vand.u32 %v506, 4294901760
    %550 = vmatpush1.msra.mxu0 %v549
    %551 = vmatprep.subr.mxu0 0.0
    %v552 = vand.u32 %v505, 4294901760
    %553 = vmatpush1.msra.mxu0 %v552
    %554 = vmatprep.subr.mxu0 0.0
    %v555 = vand.u32 %v504, 4294901760
    %556 = vmatpush1.msra.mxu0 %v555
    %557 = vmatprep.subr.mxu0 0.0
    %v558 = vand.u32 %v503, 4294901760
    %559 = vmatpush1.msra.mxu0 %v558
    %560 = vmatprep.subr.mxu0 0.0
    %v561 = vand.u32 %v502, 4294901760
    %562 = vmatpush1.msra.mxu0 %v561
    %563 = vmatprep.subr.mxu0 0.0
    %v564 = vand.u32 %v501, 4294901760
    %565 = vmatpush1.msra.mxu0 %v564
    %566 = vmatprep.subr.mxu0 0.0
    %v567 = vand.u32 %v500, 4294901760
    %568 = vmatpush1.msra.mxu0 %v567
    %569 = vmatprep.subr.mxu0 0.0
    %570 = vmatpush2.msra.mxu0 0.0
    %571 = vmatprep.subr.mxu0 0.0
    %572 = vmatpush2.msra.mxu0 0.0
    %573 = vmatprep.subr.mxu0 0.0
    %574 = vmatpush2.msra.mxu0 0.0
    %575 = vmatprep.subr.mxu0 0.0
    %576 = vmatpush2.msra.mxu0 0.0
    %577 = vmatprep.subr.mxu0 0.0
    %578 = vmatpush2.msra.mxu0 0.0
    %579 = vmatprep.subr.mxu0 0.0
    %580 = vmatpush2.msra.mxu0 0.0
    %581 = vmatprep.subr.mxu0 0.0
    %582 = vmatpush2.msra.mxu0 0.0
    %583 = vmatprep.subr.mxu0 0.0
    %584 = vmatpush2.msra.mxu0 0.0
    %585 = vmatprep.subr.mxu0 0.0
    %586 = vmatpush2.msra.mxu0 0.0
    %587 = vmatprep.subr.mxu0 0.0
    %588 = vmatpush2.msra.mxu0 0.0
    %589 = vmatprep.subr.mxu0 0.0
    %590 = vmatpush2.msra.mxu0 0.0
    %591 = vmatprep.subr.mxu0 0.0
    %592 = vmatpush2.msra.mxu0 0.0
    %593 = vmatprep.subr.mxu0 0.0
    %594 = vmatpush2.msra.mxu0 0.0
    %595 = vmatprep.subr.mxu0 0.0
    %596 = vmatpush2.msra.mxu0 0.0
    %597 = vmatprep.subr.mxu0 0.0
    %598 = vmatpush2.msra.mxu0 0.0
    %599 = vmatprep.subr.mxu0 0.0
    %600 = vmatpush2.msra.mxu0 0.0
    %601 = vmatprep.mubr.f32.mxu0 0.0
    %v602 = vand.u32 %v497, 4294901760
    %v603 = vsub.f32 %v497, %v602
    %v604 = vand.u32 %v603, 4294901760
    %v605 = vsub.f32 %v603, %v604
    %v606 = vand.u32 %v605, 4294901760
    %607 = vmatmul.mubr.f32.gmra.mxu0 %v606
    %v608 = vpop.f32.mrf.mxu0
    %v609 = vadd.f32 %v520, %v608
    %v610 = vpop.f32.mrf.mxu0
    %611 = vdwg.mxu0
    %612 = vmatprep.subr.mxu0 0.0
    %v613 = vand.u32 %v515, 4294901760
    %v614 = vsub.f32 %v515, %v613
    %v615 = vand.u32 %v614, 4294901760
    %v616 = vsub.f32 %v614, %v615
    %v617 = vand.u32 %v616, 4294901760
    %618 = vmatpush1.msra.mxu0 %v617
    %619 = vmatprep.subr.mxu0 0.0
    %v620 = vand.u32 %v514, 4294901760
    %v621 = vsub.f32 %v514, %v620
    %v622 = vand.u32 %v621, 4294901760
    %v623 = vsub.f32 %v621, %v622
    %v624 = vand.u32 %v623, 4294901760
    %625 = vmatpush1.msra.mxu0 %v624
    %626 = vmatprep.subr.mxu0 0.0
    %v627 = vand.u32 %v513, 4294901760
    %v628 = vsub.f32 %v513, %v627
    %v629 = vand.u32 %v628, 4294901760
    %v630 = vsub.f32 %v628, %v629
    %v631 = vand.u32 %v630, 4294901760
    %632 = vmatpush1.msra.mxu0 %v631
    %633 = vmatprep.subr.mxu0 0.0
    %v634 = vand.u32 %v512, 4294901760
    %v635 = vsub.f32 %v512, %v634
    %v636 = vand.u32 %v635, 4294901760
    %v637 = vsub.f32 %v635, %v636
    %v638 = vand.u32 %v637, 4294901760
    %639 = vmatpush1.msra.mxu0 %v638
    %640 = vmatprep.subr.mxu0 0.0
    %v641 = vand.u32 %v511, 4294901760
    %v642 = vsub.f32 %v511, %v641
    %v643 = vand.u32 %v642, 4294901760
    %v644 = vsub.f32 %v642, %v643
    %v645 = vand.u32 %v644, 4294901760
    %646 = vmatpush1.msra.mxu0 %v645
    %647 = vmatprep.subr.mxu0 0.0
    %v648 = vand.u32 %v510, 4294901760
    %v649 = vsub.f32 %v510, %v648
    %v650 = vand.u32 %v649, 4294901760
    %v651 = vsub.f32 %v649, %v650
    %v652 = vand.u32 %v651, 4294901760
    %653 = vmatpush1.msra.mxu0 %v652
    %654 = vmatprep.subr.mxu0 0.0
    %v655 = vand.u32 %v509, 4294901760
    %v656 = vsub.f32 %v509, %v655
    %v657 = vand.u32 %v656, 4294901760
    %v658 = vsub.f32 %v656, %v657
    %v659 = vand.u32 %v658, 4294901760
    %660 = vmatpush1.msra.mxu0 %v659
    %661 = vmatprep.subr.mxu0 0.0
    %v662 = vand.u32 %v508, 4294901760
    %v663 = vsub.f32 %v508, %v662
    %v664 = vand.u32 %v663, 4294901760
    %v665 = vsub.f32 %v663, %v664
    %v666 = vand.u32 %v665, 4294901760
    %667 = vmatpush1.msra.mxu0 %v666
    %668 = vmatprep.subr.mxu0 0.0
    %v669 = vand.u32 %v507, 4294901760
    %v670 = vsub.f32 %v507, %v669
    %v671 = vand.u32 %v670, 4294901760
    %v672 = vsub.f32 %v670, %v671
    %v673 = vand.u32 %v672, 4294901760
    %674 = vmatpush1.msra.mxu0 %v673
    %675 = vmatprep.subr.mxu0 0.0
    %v676 = vand.u32 %v506, 4294901760
    %v677 = vsub.f32 %v506, %v676
    %v678 = vand.u32 %v677, 4294901760
    %v679 = vsub.f32 %v677, %v678
    %v680 = vand.u32 %v679, 4294901760
    %681 = vmatpush1.msra.mxu0 %v680
    %682 = vmatprep.subr.mxu0 0.0
    %v683 = vand.u32 %v505, 4294901760
    %v684 = vsub.f32 %v505, %v683
    %v685 = vand.u32 %v684, 4294901760
    %v686 = vsub.f32 %v684, %v685
    %v687 = vand.u32 %v686, 4294901760
    %688 = vmatpush1.msra.mxu0 %v687
    %689 = vmatprep.subr.mxu0 0.0
    %v690 = vand.u32 %v504, 4294901760
    %v691 = vsub.f32 %v504, %v690
    %v692 = vand.u32 %v691, 4294901760
    %v693 = vsub.f32 %v691, %v692
    %v694 = vand.u32 %v693, 4294901760
    %695 = vmatpush1.msra.mxu0 %v694
    %696 = vmatprep.subr.mxu0 0.0
    %v697 = vand.u32 %v503, 4294901760
    %v698 = vsub.f32 %v503, %v697
    %v699 = vand.u32 %v698, 4294901760
    %v700 = vsub.f32 %v698, %v699
    %v701 = vand.u32 %v700, 4294901760
    %702 = vmatpush1.msra.mxu0 %v701
    %703 = vmatprep.subr.mxu0 0.0
    %v704 = vand.u32 %v502, 4294901760
    %v705 = vsub.f32 %v502, %v704
    %v706 = vand.u32 %v705, 4294901760
    %v707 = vsub.f32 %v705, %v706
    %v708 = vand.u32 %v707, 4294901760
    %709 = vmatpush1.msra.mxu0 %v708
    %710 = vmatprep.subr.mxu0 0.0
    %v711 = vand.u32 %v501, 4294901760
    %v712 = vsub.f32 %v501, %v711
    %v713 = vand.u32 %v712, 4294901760
    %v714 = vsub.f32 %v712, %v713
    %v715 = vand.u32 %v714, 4294901760
    %716 = vmatpush1.msra.mxu0 %v715
    %717 = vmatprep.subr.mxu0 0.0
    %v718 = vand.u32 %v500, 4294901760
    %v719 = vsub.f32 %v500, %v718
    %v720 = vand.u32 %v719, 4294901760
    %v721 = vsub.f32 %v719, %v720
    %v722 = vand.u32 %v721, 4294901760
    %723 = vmatpush1.msra.mxu0 %v722
    %724 = vmatprep.subr.mxu0 0.0
    %725 = vmatpush2.msra.mxu0 0.0
    %726 = vmatprep.subr.mxu0 0.0
    %727 = vmatpush2.msra.mxu0 0.0
    %728 = vmatprep.subr.mxu0 0.0
    %729 = vmatpush2.msra.mxu0 0.0
    %730 = vmatprep.subr.mxu0 0.0
    %731 = vmatpush2.msra.mxu0 0.0
    %732 = vmatprep.subr.mxu0 0.0
    %733 = vmatpush2.msra.mxu0 0.0
    %734 = vmatprep.subr.mxu0 0.0
    %735 = vmatpush2.msra.mxu0 0.0
    %736 = vmatprep.subr.mxu0 0.0
    %737 = vmatpush2.msra.mxu0 0.0
    %738 = vmatprep.subr.mxu0 0.0
    %739 = vmatpush2.msra.mxu0 0.0
    %740 = vmatprep.subr.mxu0 0.0
    %741 = vmatpush2.msra.mxu0 0.0
    %742 = vmatprep.subr.mxu0 0.0
    %743 = vmatpush2.msra.mxu0 0.0
    %744 = vmatprep.subr.mxu0 0.0
    %745 = vmatpush2.msra.mxu0 0.0
    %746 = vmatprep.subr.mxu0 0.0
    %747 = vmatpush2.msra.mxu0 0.0
    %748 = vmatprep.subr.mxu0 0.0
    %749 = vmatpush2.msra.mxu0 0.0
    %750 = vmatprep.subr.mxu0 0.0
    %751 = vmatpush2.msra.mxu0 0.0
    %752 = vmatprep.subr.mxu0 0.0
    %753 = vmatpush2.msra.mxu0 0.0
    %754 = vmatprep.subr.mxu0 0.0
    %755 = vmatpush2.msra.mxu0 0.0
    %756 = vmatprep.mubr.f32.mxu0 0.0
    %v757 = vand.u32 %v497, 4294901760
    %758 = vmatmul.mubr.f32.gmra.mxu0 %v757
    %v759 = vpop.f32.mrf.mxu0
    %v760 = vadd.f32 %v609, %v759
    %v761 = vpop.f32.mrf.mxu0
    %762 = vdwg.mxu0
    %763 = vmatprep.subr.mxu0 0.0
    %v764 = vand.u32 %v515, 4294901760
    %v765 = vsub.f32 %v515, %v764
    %766 = vmatpush1.msra.mxu0 %v765
    %767 = vmatprep.subr.mxu0 0.0
    %v768 = vand.u32 %v514, 4294901760
    %v769 = vsub.f32 %v514, %v768
    %770 = vmatpush1.msra.mxu0 %v769
    %771 = vmatprep.subr.mxu0 0.0
    %v772 = vand.u32 %v513, 4294901760
    %v773 = vsub.f32 %v513, %v772
    %774 = vmatpush1.msra.mxu0 %v773
    %775 = vmatprep.subr.mxu0 0.0
    %v776 = vand.u32 %v512, 4294901760
    %v777 = vsub.f32 %v512, %v776
    %778 = vmatpush1.msra.mxu0 %v777
    %779 = vmatprep.subr.mxu0 0.0
    %v780 = vand.u32 %v511, 4294901760
    %v781 = vsub.f32 %v511, %v780
    %782 = vmatpush1.msra.mxu0 %v781
    %783 = vmatprep.subr.mxu0 0.0
    %v784 = vand.u32 %v510, 4294901760
    %v785 = vsub.f32 %v510, %v784
    %786 = vmatpush1.msra.mxu0 %v785
    %787 = vmatprep.subr.mxu0 0.0
    %v788 = vand.u32 %v509, 4294901760
    %v789 = vsub.f32 %v509, %v788
    %790 = vmatpush1.msra.mxu0 %v789
    %791 = vmatprep.subr.mxu0 0.0
    %v792 = vand.u32 %v508, 4294901760
    %v793 = vsub.f32 %v508, %v792
    %794 = vmatpush1.msra.mxu0 %v793
    %795 = vmatprep.subr.mxu0 0.0
    %v796 = vand.u32 %v507, 4294901760
    %v797 = vsub.f32 %v507, %v796
    %798 = vmatpush1.msra.mxu0 %v797
    %799 = vmatprep.subr.mxu0 0.0
    %v800 = vand.u32 %v506, 4294901760
    %v801 = vsub.f32 %v506, %v800
    %802 = vmatpush1.msra.mxu0 %v801
    %803 = vmatprep.subr.mxu0 0.0
    %v804 = vand.u32 %v505, 4294901760
    %v805 = vsub.f32 %v505, %v804
    %806 = vmatpush1.msra.mxu0 %v805
    %807 = vmatprep.subr.mxu0 0.0
    %v808 = vand.u32 %v504, 4294901760
    %v809 = vsub.f32 %v504, %v808
    %810 = vmatpush1.msra.mxu0 %v809
    %811 = vmatprep.subr.mxu0 0.0
    %v812 = vand.u32 %v503, 4294901760
    %v813 = vsub.f32 %v503, %v812
    %814 = vmatpush1.msra.mxu0 %v813
    %815 = vmatprep.subr.mxu0 0.0
    %v816 = vand.u32 %v502, 4294901760
    %v817 = vsub.f32 %v502, %v816
    %818 = vmatpush1.msra.mxu0 %v817
    %819 = vmatprep.subr.mxu0 0.0
    %v820 = vand.u32 %v501, 4294901760
    %v821 = vsub.f32 %v501, %v820
    %822 = vmatpush1.msra.mxu0 %v821
    %823 = vmatprep.subr.mxu0 0.0
    %v824 = vand.u32 %v500, 4294901760
    %v825 = vsub.f32 %v500, %v824
    %826 = vmatpush1.msra.mxu0 %v825
    %827 = vmatprep.subr.mxu0 0.0
    %828 = vmatpush2.msra.mxu0 0.0
    %829 = vmatprep.subr.mxu0 0.0
    %830 = vmatpush2.msra.mxu0 0.0
    %831 = vmatprep.subr.mxu0 0.0
    %832 = vmatpush2.msra.mxu0 0.0
    %833 = vmatprep.subr.mxu0 0.0
    %834 = vmatpush2.msra.mxu0 0.0
    %835 = vmatprep.subr.mxu0 0.0
    %836 = vmatpush2.msra.mxu0 0.0
    %837 = vmatprep.subr.mxu0 0.0
    %838 = vmatpush2.msra.mxu0 0.0
    %839 = vmatprep.subr.mxu0 0.0
    %840 = vmatpush2.msra.mxu0 0.0
    %841 = vmatprep.subr.mxu0 0.0
    %842 = vmatpush2.msra.mxu0 0.0
    %843 = vmatprep.subr.mxu0 0.0
    %844 = vmatpush2.msra.mxu0 0.0
    %845 = vmatprep.subr.mxu0 0.0
    %846 = vmatpush2.msra.mxu0 0.0
    %847 = vmatprep.subr.mxu0 0.0
    %848 = vmatpush2.msra.mxu0 0.0
    %849 = vmatprep.subr.mxu0 0.0
    %850 = vmatpush2.msra.mxu0 0.0
    %851 = vmatprep.subr.mxu0 0.0
    %852 = vmatpush2.msra.mxu0 0.0
    %853 = vmatprep.subr.mxu0 0.0
    %854 = vmatpush2.msra.mxu0 0.0
    %855 = vmatprep.subr.mxu0 0.0
    %856 = vmatpush2.msra.mxu0 0.0
    %857 = vmatprep.subr.mxu0 0.0
    %858 = vmatpush2.msra.mxu0 0.0
    %859 = vmatprep.mubr.f32.mxu0 0.0
    %v860 = vand.u32 %v497, 4294901760
    %v861 = vsub.f32 %v497, %v860
    %862 = vmatmul.mubr.f32.gmra.mxu0 %v861
    %v863 = vpop.f32.mrf.mxu0
    %v864 = vadd.f32 %v760, %v863
    %v865 = vpop.f32.mrf.mxu0
    %866 = vdwg.mxu0
    %867 = vmatprep.subr.mxu0 0.0
    %v868 = vand.u32 %v515, 4294901760
    %869 = vmatpush1.msra.mxu0 %v868
    %870 = vmatprep.subr.mxu0 0.0
    %v871 = vand.u32 %v514, 4294901760
    %872 = vmatpush1.msra.mxu0 %v871
    %873 = vmatprep.subr.mxu0 0.0
    %v874 = vand.u32 %v513, 4294901760
    %875 = vmatpush1.msra.mxu0 %v874
    %876 = vmatprep.subr.mxu0 0.0
    %v877 = vand.u32 %v512, 4294901760
    %878 = vmatpush1.msra.mxu0 %v877
    %879 = vmatprep.subr.mxu0 0.0
    %v880 = vand.u32 %v511, 4294901760
    %881 = vmatpush1.msra.mxu0 %v880
    %882 = vmatprep.subr.mxu0 0.0
    %v883 = vand.u32 %v510, 4294901760
    %884 = vmatpush1.msra.mxu0 %v883
    %885 = vmatprep.subr.mxu0 0.0
    %v886 = vand.u32 %v509, 4294901760
    %887 = vmatpush1.msra.mxu0 %v886
    %888 = vmatprep.subr.mxu0 0.0
    %v889 = vand.u32 %v508, 4294901760
    %890 = vmatpush1.msra.mxu0 %v889
    %891 = vmatprep.subr.mxu0 0.0
    %v892 = vand.u32 %v507, 4294901760
    %893 = vmatpush1.msra.mxu0 %v892
    %894 = vmatprep.subr.mxu0 0.0
    %v895 = vand.u32 %v506, 4294901760
    %896 = vmatpush1.msra.mxu0 %v895
    %897 = vmatprep.subr.mxu0 0.0
    %v898 = vand.u32 %v505, 4294901760
    %899 = vmatpush1.msra.mxu0 %v898
    %900 = vmatprep.subr.mxu0 0.0
    %v901 = vand.u32 %v504, 4294901760
    %902 = vmatpush1.msra.mxu0 %v901
    %903 = vmatprep.subr.mxu0 0.0
    %v904 = vand.u32 %v503, 4294901760
    %905 = vmatpush1.msra.mxu0 %v904
    %906 = vmatprep.subr.mxu0 0.0
    %v907 = vand.u32 %v502, 4294901760
    %908 = vmatpush1.msra.mxu0 %v907
    %909 = vmatprep.subr.mxu0 0.0
    %v910 = vand.u32 %v501, 4294901760
    %911 = vmatpush1.msra.mxu0 %v910
    %912 = vmatprep.subr.mxu0 0.0
    %v913 = vand.u32 %v500, 4294901760
    %914 = vmatpush1.msra.mxu0 %v913
    %915 = vmatprep.subr.mxu0 0.0
    %916 = vmatpush2.msra.mxu0 0.0
    %917 = vmatprep.subr.mxu0 0.0
    %918 = vmatpush2.msra.mxu0 0.0
    %919 = vmatprep.subr.mxu0 0.0
    %920 = vmatpush2.msra.mxu0 0.0
    %921 = vmatprep.subr.mxu0 0.0
    %922 = vmatpush2.msra.mxu0 0.0
    %923 = vmatprep.subr.mxu0 0.0
    %924 = vmatpush2.msra.mxu0 0.0
    %925 = vmatprep.subr.mxu0 0.0
    %926 = vmatpush2.msra.mxu0 0.0
    %927 = vmatprep.subr.mxu0 0.0
    %928 = vmatpush2.msra.mxu0 0.0
    %929 = vmatprep.subr.mxu0 0.0
    %930 = vmatpush2.msra.mxu0 0.0
    %931 = vmatprep.subr.mxu0 0.0
    %932 = vmatpush2.msra.mxu0 0.0
    %933 = vmatprep.subr.mxu0 0.0
    %934 = vmatpush2.msra.mxu0 0.0
    %935 = vmatprep.subr.mxu0 0.0
    %936 = vmatpush2.msra.mxu0 0.0
    %937 = vmatprep.subr.mxu0 0.0
    %938 = vmatpush2.msra.mxu0 0.0
    %939 = vmatprep.subr.mxu0 0.0
    %940 = vmatpush2.msra.mxu0 0.0
    %941 = vmatprep.subr.mxu0 0.0
    %942 = vmatpush2.msra.mxu0 0.0
    %943 = vmatprep.subr.mxu0 0.0
    %944 = vmatpush2.msra.mxu0 0.0
    %945 = vmatprep.subr.mxu0 0.0
    %946 = vmatpush2.msra.mxu0 0.0
    %947 = vmatprep.mubr.f32.mxu0 0.0
    %v948 = vand.u32 %v497, 4294901760
    %v949 = vsub.f32 %v497, %v948
    %v950 = vand.u32 %v949, 4294901760
    %951 = vmatmul.mubr.f32.gmra.mxu0 %v950
    %v952 = vpop.f32.mrf.mxu0
    %v953 = vadd.f32 %v864, %v952
    %v954 = vpop.f32.mrf.mxu0
    %955 = vdwg.mxu0
    %956 = vmatprep.subr.mxu0 0.0
    %v957 = vand.u32 %v515, 4294901760
    %v958 = vsub.f32 %v515, %v957
    %v959 = vand.u32 %v958, 4294901760
    %960 = vmatpush1.msra.mxu0 %v959
    %961 = vmatprep.subr.mxu0 0.0
    %v962 = vand.u32 %v514, 4294901760
    %v963 = vsub.f32 %v514, %v962
    %v964 = vand.u32 %v963, 4294901760
    %965 = vmatpush1.msra.mxu0 %v964
    %966 = vmatprep.subr.mxu0 0.0
    %v967 = vand.u32 %v513, 4294901760
    %v968 = vsub.f32 %v513, %v967
    %v969 = vand.u32 %v968, 4294901760
    %970 = vmatpush1.msra.mxu0 %v969
    %971 = vmatprep.subr.mxu0 0.0
    %v972 = vand.u32 %v512, 4294901760
    %v973 = vsub.f32 %v512, %v972
    %v974 = vand.u32 %v973, 4294901760
    %975 = vmatpush1.msra.mxu0 %v974
    %976 = vmatprep.subr.mxu0 0.0
    %v977 = vand.u32 %v511, 4294901760
    %v978 = vsub.f32 %v511, %v977
    %v979 = vand.u32 %v978, 4294901760
    %980 = vmatpush1.msra.mxu0 %v979
    %981 = vmatprep.subr.mxu0 0.0
    %v982 = vand.u32 %v510, 4294901760
    %v983 = vsub.f32 %v510, %v982
    %v984 = vand.u32 %v983, 4294901760
    %985 = vmatpush1.msra.mxu0 %v984
    %986 = vmatprep.subr.mxu0 0.0
    %v987 = vand.u32 %v509, 4294901760
    %v988 = vsub.f32 %v509, %v987
    %v989 = vand.u32 %v988, 4294901760
    %990 = vmatpush1.msra.mxu0 %v989
    %991 = vmatprep.subr.mxu0 0.0
    %v992 = vand.u32 %v508, 4294901760
    %v993 = vsub.f32 %v508, %v992
    %v994 = vand.u32 %v993, 4294901760
    %995 = vmatpush1.msra.mxu0 %v994
    %996 = vmatprep.subr.mxu0 0.0
    %v997 = vand.u32 %v507, 4294901760
    %v998 = vsub.f32 %v507, %v997
    %v999 = vand.u32 %v998, 4294901760
    %1000 = vmatpush1.msra.mxu0 %v999
    %1001 = vmatprep.subr.mxu0 0.0
    %v1002 = vand.u32 %v506, 4294901760
    %v1003 = vsub.f32 %v506, %v1002
    %v1004 = vand.u32 %v1003, 4294901760
    %1005 = vmatpush1.msra.mxu0 %v1004
    %1006 = vmatprep.subr.mxu0 0.0
    %v1007 = vand.u32 %v505, 4294901760
    %v1008 = vsub.f32 %v505, %v1007
    %v1009 = vand.u32 %v1008, 4294901760
    %1010 = vmatpush1.msra.mxu0 %v1009
    %1011 = vmatprep.subr.mxu0 0.0
    %v1012 = vand.u32 %v504, 4294901760
    %v1013 = vsub.f32 %v504, %v1012
    %v1014 = vand.u32 %v1013, 4294901760
    %1015 = vmatpush1.msra.mxu0 %v1014
    %1016 = vmatprep.subr.mxu0 0.0
    %v1017 = vand.u32 %v503, 4294901760
    %v1018 = vsub.f32 %v503, %v1017
    %v1019 = vand.u32 %v1018, 4294901760
    %1020 = vmatpush1.msra.mxu0 %v1019
    %1021 = vmatprep.subr.mxu0 0.0
    %v1022 = vand.u32 %v502, 4294901760
    %v1023 = vsub.f32 %v502, %v1022
    %v1024 = vand.u32 %v1023, 4294901760
    %1025 = vmatpush1.msra.mxu0 %v1024
    %1026 = vmatprep.subr.mxu0 0.0
    %v1027 = vand.u32 %v501, 4294901760
    %v1028 = vsub.f32 %v501, %v1027
    %v1029 = vand.u32 %v1028, 4294901760
    %1030 = vmatpush1.msra.mxu0 %v1029
    %1031 = vmatprep.subr.mxu0 0.0
    %v1032 = vand.u32 %v500, 4294901760
    %v1033 = vsub.f32 %v500, %v1032
    %v1034 = vand.u32 %v1033, 4294901760
    %1035 = vmatpush1.msra.mxu0 %v1034
    %1036 = vmatprep.subr.mxu0 0.0
    %1037 = vmatpush2.msra.mxu0 0.0
    %1038 = vmatprep.subr.mxu0 0.0
    %1039 = vmatpush2.msra.mxu0 0.0
    %1040 = vmatprep.subr.mxu0 0.0
    %1041 = vmatpush2.msra.mxu0 0.0
    %1042 = vmatprep.subr.mxu0 0.0
    %1043 = vmatpush2.msra.mxu0 0.0
    %1044 = vmatprep.subr.mxu0 0.0
    %1045 = vmatpush2.msra.mxu0 0.0
    %1046 = vmatprep.subr.mxu0 0.0
    %1047 = vmatpush2.msra.mxu0 0.0
    %1048 = vmatprep.subr.mxu0 0.0
    %1049 = vmatpush2.msra.mxu0 0.0
    %1050 = vmatprep.subr.mxu0 0.0
    %1051 = vmatpush2.msra.mxu0 0.0
    %1052 = vmatprep.subr.mxu0 0.0
    %1053 = vmatpush2.msra.mxu0 0.0
    %1054 = vmatprep.subr.mxu0 0.0
    %1055 = vmatpush2.msra.mxu0 0.0
    %1056 = vmatprep.subr.mxu0 0.0
    %1057 = vmatpush2.msra.mxu0 0.0
    %1058 = vmatprep.subr.mxu0 0.0
    %1059 = vmatpush2.msra.mxu0 0.0
    %1060 = vmatprep.subr.mxu0 0.0
    %1061 = vmatpush2.msra.mxu0 0.0
    %1062 = vmatprep.subr.mxu0 0.0
    %1063 = vmatpush2.msra.mxu0 0.0
    %1064 = vmatprep.subr.mxu0 0.0
    %1065 = vmatpush2.msra.mxu0 0.0
    %1066 = vmatprep.subr.mxu0 0.0
    %1067 = vmatpush2.msra.mxu0 0.0
    %1068 = vmatprep.mubr.f32.mxu0 0.0
    %v1069 = vand.u32 %v497, 4294901760
    %1070 = vmatmul.mubr.f32.gmra.mxu0 %v1069
    %v1071 = vpop.f32.mrf.mxu0
    %v1072 = vadd.f32 %v953, %v1071
    %v1073 = vpop.f32.mrf.mxu0
    %1074 = vdwg.mxu0
    %1075 = vmatprep.subr.mxu0 0.0
    %v1076 = vand.u32 %v515, 4294901760
    %1077 = vmatpush1.msra.mxu0 %v1076
    %1078 = vmatprep.subr.mxu0 0.0
    %v1079 = vand.u32 %v514, 4294901760
    %1080 = vmatpush1.msra.mxu0 %v1079
    %1081 = vmatprep.subr.mxu0 0.0
    %v1082 = vand.u32 %v513, 4294901760
    %1083 = vmatpush1.msra.mxu0 %v1082
    %1084 = vmatprep.subr.mxu0 0.0
    %v1085 = vand.u32 %v512, 4294901760
    %1086 = vmatpush1.msra.mxu0 %v1085
    %1087 = vmatprep.subr.mxu0 0.0
    %v1088 = vand.u32 %v511, 4294901760
    %1089 = vmatpush1.msra.mxu0 %v1088
    %1090 = vmatprep.subr.mxu0 0.0
    %v1091 = vand.u32 %v510, 4294901760
    %1092 = vmatpush1.msra.mxu0 %v1091
    %1093 = vmatprep.subr.mxu0 0.0
    %v1094 = vand.u32 %v509, 4294901760
    %1095 = vmatpush1.msra.mxu0 %v1094
    %1096 = vmatprep.subr.mxu0 0.0
    %v1097 = vand.u32 %v508, 4294901760
    %1098 = vmatpush1.msra.mxu0 %v1097
    %1099 = vmatprep.subr.mxu0 0.0
    %v1100 = vand.u32 %v507, 4294901760
    %1101 = vmatpush1.msra.mxu0 %v1100
    %1102 = vmatprep.subr.mxu0 0.0
    %v1103 = vand.u32 %v506, 4294901760
    %1104 = vmatpush1.msra.mxu0 %v1103
    %1105 = vmatprep.subr.mxu0 0.0
    %v1106 = vand.u32 %v505, 4294901760
    %1107 = vmatpush1.msra.mxu0 %v1106
    %1108 = vmatprep.subr.mxu0 0.0
    %v1109 = vand.u32 %v504, 4294901760
    %1110 = vmatpush1.msra.mxu0 %v1109
    %1111 = vmatprep.subr.mxu0 0.0
    %v1112 = vand.u32 %v503, 4294901760
    %1113 = vmatpush1.msra.mxu0 %v1112
    %1114 = vmatprep.subr.mxu0 0.0
    %v1115 = vand.u32 %v502, 4294901760
    %1116 = vmatpush1.msra.mxu0 %v1115
    %1117 = vmatprep.subr.mxu0 0.0
    %v1118 = vand.u32 %v501, 4294901760
    %1119 = vmatpush1.msra.mxu0 %v1118
    %1120 = vmatprep.subr.mxu0 0.0
    %v1121 = vand.u32 %v500, 4294901760
    %1122 = vmatpush1.msra.mxu0 %v1121
    %1123 = vmatprep.subr.mxu0 0.0
    %1124 = vmatpush2.msra.mxu0 0.0
    %1125 = vmatprep.subr.mxu0 0.0
    %1126 = vmatpush2.msra.mxu0 0.0
    %1127 = vmatprep.subr.mxu0 0.0
    %1128 = vmatpush2.msra.mxu0 0.0
    %1129 = vmatprep.subr.mxu0 0.0
    %1130 = vmatpush2.msra.mxu0 0.0
    %1131 = vmatprep.subr.mxu0 0.0
    %1132 = vmatpush2.msra.mxu0 0.0
    %1133 = vmatprep.subr.mxu0 0.0
    %1134 = vmatpush2.msra.mxu0 0.0
    %1135 = vmatprep.subr.mxu0 0.0
    %1136 = vmatpush2.msra.mxu0 0.0
    %1137 = vmatprep.subr.mxu0 0.0
    %1138 = vmatpush2.msra.mxu0 0.0
    %1139 = vmatprep.subr.mxu0 0.0
    %1140 = vmatpush2.msra.mxu0 0.0
    %1141 = vmatprep.subr.mxu0 0.0
    %1142 = vmatpush2.msra.mxu0 0.0
    %1143 = vmatprep.subr.mxu0 0.0
    %1144 = vmatpush2.msra.mxu0 0.0
    %1145 = vmatprep.subr.mxu0 0.0
    %1146 = vmatpush2.msra.mxu0 0.0
    %1147 = vmatprep.subr.mxu0 0.0
    %1148 = vmatpush2.msra.mxu0 0.0
    %1149 = vmatprep.subr.mxu0 0.0
    %1150 = vmatpush2.msra.mxu0 0.0
    %1151 = vmatprep.subr.mxu0 0.0
    %1152 = vmatpush2.msra.mxu0 0.0
    %1153 = vmatprep.subr.mxu0 0.0
    %1154 = vmatpush2.msra.mxu0 0.0
    %1155 = vmatprep.mubr.f32.mxu0 0.0
    %v1156 = vand.u32 %v497, 4294901760
    %1157 = vmatmul.mubr.f32.gmra.mxu0 %v1156
    %v1158 = vpop.f32.mrf.mxu0
    %v1159 = vadd.f32 %v1072, %v1158
    %v1160 = vpop.f32.mrf.mxu0
    %1161 = vdwg.mxu0
    %v1162 = vmax.f32 %v1159, 0.0
    %v1163 = vld [vmem:[#allocation2 + $0x98] sm:$0xff]
    %v1164 = vld [vmem:[#allocation2 + $0xa0] sm:$0xff]
    %v1165 = vld [vmem:[#allocation2 + $0xa8] sm:$0xff]
    %v1166 = vld [vmem:[#allocation2 + $0xb0] sm:$0xff]
    %v1167 = vld [vmem:[#allocation2 + $0xb8] sm:$0xff]
    %v1168 = vld [vmem:[#allocation2 + $0xc0] sm:$0xff]
    %v1169 = vld [vmem:[#allocation2 + $0xc8] sm:$0xff]
    %v1170 = vld [vmem:[#allocation2 + $0xd0] sm:$0xff]
    %v1171 = vld [vmem:[#allocation2 + $0xd8] sm:$0xff]
    %v1172 = vld [vmem:[#allocation2 + $0xe0] sm:$0xff]
    %v1173 = vld [vmem:[#allocation2 + $0xe8] sm:$0xff]
    %v1174 = vld [vmem:[#allocation2 + $0xf0] sm:$0xff]
    %v1175 = vld [vmem:[#allocation2 + $0xf8] sm:$0xff]
    %v1176 = vld [vmem:[#allocation2 + $0x100] sm:$0xff]
    %v1177 = vld [vmem:[#allocation2 + $0x108] sm:$0xff]
    %v1178 = vld [vmem:[#allocation2 + $0x110] sm:$0xff]
    %v1179 = vld [vmem:[#allocation2 + $0x118] sm:$0x1]
    %v1180 = vlaneseq
    %v1181 = vshrl.u32 %v1180, 7
    %v1182 = vsub.s32 0, %v1181
    %v1183 = vrot.slane %v1179, %v1182
    %1184 = vmatprep.subr.mxu0 0.0
    %v1185 = vand.u32 %v1178, 4294901760
    %1186 = vmatpush1.msra.mxu0 %v1185
    %1187 = vmatprep.subr.mxu0 0.0
    %v1188 = vand.u32 %v1177, 4294901760
    %1189 = vmatpush1.msra.mxu0 %v1188
    %1190 = vmatprep.subr.mxu0 0.0
    %v1191 = vand.u32 %v1176, 4294901760
    %1192 = vmatpush1.msra.mxu0 %v1191
    %1193 = vmatprep.subr.mxu0 0.0
    %v1194 = vand.u32 %v1175, 4294901760
    %1195 = vmatpush1.msra.mxu0 %v1194
    %1196 = vmatprep.subr.mxu0 0.0
    %v1197 = vand.u32 %v1174, 4294901760
    %1198 = vmatpush1.msra.mxu0 %v1197
    %1199 = vmatprep.subr.mxu0 0.0
    %v1200 = vand.u32 %v1173, 4294901760
    %1201 = vmatpush1.msra.mxu0 %v1200
    %1202 = vmatprep.subr.mxu0 0.0
    %v1203 = vand.u32 %v1172, 4294901760
    %1204 = vmatpush1.msra.mxu0 %v1203
    %1205 = vmatprep.subr.mxu0 0.0
    %v1206 = vand.u32 %v1171, 4294901760
    %1207 = vmatpush1.msra.mxu0 %v1206
    %1208 = vmatprep.subr.mxu0 0.0
    %v1209 = vand.u32 %v1170, 4294901760
    %1210 = vmatpush1.msra.mxu0 %v1209
    %1211 = vmatprep.subr.mxu0 0.0
    %v1212 = vand.u32 %v1169, 4294901760
    %1213 = vmatpush1.msra.mxu0 %v1212
    %1214 = vmatprep.subr.mxu0 0.0
    %v1215 = vand.u32 %v1168, 4294901760
    %1216 = vmatpush1.msra.mxu0 %v1215
    %1217 = vmatprep.subr.mxu0 0.0
    %v1218 = vand.u32 %v1167, 4294901760
    %1219 = vmatpush1.msra.mxu0 %v1218
    %1220 = vmatprep.subr.mxu0 0.0
    %v1221 = vand.u32 %v1166, 4294901760
    %1222 = vmatpush1.msra.mxu0 %v1221
    %1223 = vmatprep.subr.mxu0 0.0
    %v1224 = vand.u32 %v1165, 4294901760
    %1225 = vmatpush1.msra.mxu0 %v1224
    %1226 = vmatprep.subr.mxu0 0.0
    %v1227 = vand.u32 %v1164, 4294901760
    %1228 = vmatpush1.msra.mxu0 %v1227
    %1229 = vmatprep.subr.mxu0 0.0
    %v1230 = vand.u32 %v1163, 4294901760
    %1231 = vmatpush1.msra.mxu0 %v1230
    %1232 = vmatprep.subr.mxu0 0.0
    %1233 = vmatpush2.msra.mxu0 0.0
    %1234 = vmatprep.subr.mxu0 0.0
    %1235 = vmatpush2.msra.mxu0 0.0
    %1236 = vmatprep.subr.mxu0 0.0
    %1237 = vmatpush2.msra.mxu0 0.0
    %1238 = vmatprep.subr.mxu0 0.0
    %1239 = vmatpush2.msra.mxu0 0.0
    %1240 = vmatprep.subr.mxu0 0.0
    %1241 = vmatpush2.msra.mxu0 0.0
    %1242 = vmatprep.subr.mxu0 0.0
    %1243 = vmatpush2.msra.mxu0 0.0
    %1244 = vmatprep.subr.mxu0 0.0
    %1245 = vmatpush2.msra.mxu0 0.0
    %1246 = vmatprep.subr.mxu0 0.0
    %1247 = vmatpush2.msra.mxu0 0.0
    %1248 = vmatprep.subr.mxu0 0.0
    %1249 = vmatpush2.msra.mxu0 0.0
    %1250 = vmatprep.subr.mxu0 0.0
    %1251 = vmatpush2.msra.mxu0 0.0
    %1252 = vmatprep.subr.mxu0 0.0
    %1253 = vmatpush2.msra.mxu0 0.0
    %1254 = vmatprep.subr.mxu0 0.0
    %1255 = vmatpush2.msra.mxu0 0.0
    %1256 = vmatprep.subr.mxu0 0.0
    %1257 = vmatpush2.msra.mxu0 0.0
    %1258 = vmatprep.subr.mxu0 0.0
    %1259 = vmatpush2.msra.mxu0 0.0
    %1260 = vmatprep.subr.mxu0 0.0
    %1261 = vmatpush2.msra.mxu0 0.0
    %1262 = vmatprep.subr.mxu0 0.0
    %1263 = vmatpush2.msra.mxu0 0.0
    %1264 = vmatprep.mubr.f32.mxu0 0.0
    %v1265 = vand.u32 %v1162, 4294901760
    %v1266 = vsub.f32 %v1162, %v1265
    %v1267 = vand.u32 %v1266, 4294901760
    %v1268 = vsub.f32 %v1266, %v1267
    %v1269 = vand.u32 %v1268, 4294901760
    %1270 = vmatmul.mubr.f32.gmra.mxu0 %v1269
    %v1271 = vpop.f32.mrf.mxu0
    %v1272 = vadd.f32 %v1183, %v1271
    %v1273 = vpop.f32.mrf.mxu0
    %1274 = vdwg.mxu0
    %1275 = vmatprep.subr.mxu0 0.0
    %v1276 = vand.u32 %v1178, 4294901760
    %v1277 = vsub.f32 %v1178, %v1276
    %v1278 = vand.u32 %v1277, 4294901760
    %v1279 = vsub.f32 %v1277, %v1278
    %v1280 = vand.u32 %v1279, 4294901760
    %1281 = vmatpush1.msra.mxu0 %v1280
    %1282 = vmatprep.subr.mxu0 0.0
    %v1283 = vand.u32 %v1177, 4294901760
    %v1284 = vsub.f32 %v1177, %v1283
    %v1285 = vand.u32 %v1284, 4294901760
    %v1286 = vsub.f32 %v1284, %v1285
    %v1287 = vand.u32 %v1286, 4294901760
    %1288 = vmatpush1.msra.mxu0 %v1287
    %1289 = vmatprep.subr.mxu0 0.0
    %v1290 = vand.u32 %v1176, 4294901760
    %v1291 = vsub.f32 %v1176, %v1290
    %v1292 = vand.u32 %v1291, 4294901760
    %v1293 = vsub.f32 %v1291, %v1292
    %v1294 = vand.u32 %v1293, 4294901760
    %1295 = vmatpush1.msra.mxu0 %v1294
    %1296 = vmatprep.subr.mxu0 0.0
    %v1297 = vand.u32 %v1175, 4294901760
    %v1298 = vsub.f32 %v1175, %v1297
    %v1299 = vand.u32 %v1298, 4294901760
    %v1300 = vsub.f32 %v1298, %v1299
    %v1301 = vand.u32 %v1300, 4294901760
    %1302 = vmatpush1.msra.mxu0 %v1301
    %1303 = vmatprep.subr.mxu0 0.0
    %v1304 = vand.u32 %v1174, 4294901760
    %v1305 = vsub.f32 %v1174, %v1304
    %v1306 = vand.u32 %v1305, 4294901760
    %v1307 = vsub.f32 %v1305, %v1306
    %v1308 = vand.u32 %v1307, 4294901760
    %1309 = vmatpush1.msra.mxu0 %v1308
    %1310 = vmatprep.subr.mxu0 0.0
    %v1311 = vand.u32 %v1173, 4294901760
    %v1312 = vsub.f32 %v1173, %v1311
    %v1313 = vand.u32 %v1312, 4294901760
    %v1314 = vsub.f32 %v1312, %v1313
    %v1315 = vand.u32 %v1314, 4294901760
    %1316 = vmatpush1.msra.mxu0 %v1315
    %1317 = vmatprep.subr.mxu0 0.0
    %v1318 = vand.u32 %v1172, 4294901760
    %v1319 = vsub.f32 %v1172, %v1318
    %v1320 = vand.u32 %v1319, 4294901760
    %v1321 = vsub.f32 %v1319, %v1320
    %v1322 = vand.u32 %v1321, 4294901760
    %1323 = vmatpush1.msra.mxu0 %v1322
    %1324 = vmatprep.subr.mxu0 0.0
    %v1325 = vand.u32 %v1171, 4294901760
    %v1326 = vsub.f32 %v1171, %v1325
    %v1327 = vand.u32 %v1326, 4294901760
    %v1328 = vsub.f32 %v1326, %v1327
    %v1329 = vand.u32 %v1328, 4294901760
    %1330 = vmatpush1.msra.mxu0 %v1329
    %1331 = vmatprep.subr.mxu0 0.0
    %v1332 = vand.u32 %v1170, 4294901760
    %v1333 = vsub.f32 %v1170, %v1332
    %v1334 = vand.u32 %v1333, 4294901760
    %v1335 = vsub.f32 %v1333, %v1334
    %v1336 = vand.u32 %v1335, 4294901760
    %1337 = vmatpush1.msra.mxu0 %v1336
    %1338 = vmatprep.subr.mxu0 0.0
    %v1339 = vand.u32 %v1169, 4294901760
    %v1340 = vsub.f32 %v1169, %v1339
    %v1341 = vand.u32 %v1340, 4294901760
    %v1342 = vsub.f32 %v1340, %v1341
    %v1343 = vand.u32 %v1342, 4294901760
    %1344 = vmatpush1.msra.mxu0 %v1343
    %1345 = vmatprep.subr.mxu0 0.0
    %v1346 = vand.u32 %v1168, 4294901760
    %v1347 = vsub.f32 %v1168, %v1346
    %v1348 = vand.u32 %v1347, 4294901760
    %v1349 = vsub.f32 %v1347, %v1348
    %v1350 = vand.u32 %v1349, 4294901760
    %1351 = vmatpush1.msra.mxu0 %v1350
    %1352 = vmatprep.subr.mxu0 0.0
    %v1353 = vand.u32 %v1167, 4294901760
    %v1354 = vsub.f32 %v1167, %v1353
    %v1355 = vand.u32 %v1354, 4294901760
    %v1356 = vsub.f32 %v1354, %v1355
    %v1357 = vand.u32 %v1356, 4294901760
    %1358 = vmatpush1.msra.mxu0 %v1357
    %1359 = vmatprep.subr.mxu0 0.0
    %v1360 = vand.u32 %v1166, 4294901760
    %v1361 = vsub.f32 %v1166, %v1360
    %v1362 = vand.u32 %v1361, 4294901760
    %v1363 = vsub.f32 %v1361, %v1362
    %v1364 = vand.u32 %v1363, 4294901760
    %1365 = vmatpush1.msra.mxu0 %v1364
    %1366 = vmatprep.subr.mxu0 0.0
    %v1367 = vand.u32 %v1165, 4294901760
    %v1368 = vsub.f32 %v1165, %v1367
    %v1369 = vand.u32 %v1368, 4294901760
    %v1370 = vsub.f32 %v1368, %v1369
    %v1371 = vand.u32 %v1370, 4294901760
    %1372 = vmatpush1.msra.mxu0 %v1371
    %1373 = vmatprep.subr.mxu0 0.0
    %v1374 = vand.u32 %v1164, 4294901760
    %v1375 = vsub.f32 %v1164, %v1374
    %v1376 = vand.u32 %v1375, 4294901760
    %v1377 = vsub.f32 %v1375, %v1376
    %v1378 = vand.u32 %v1377, 4294901760
    %1379 = vmatpush1.msra.mxu0 %v1378
    %1380 = vmatprep.subr.mxu0 0.0
    %v1381 = vand.u32 %v1163, 4294901760
    %v1382 = vsub.f32 %v1163, %v1381
    %v1383 = vand.u32 %v1382, 4294901760
    %v1384 = vsub.f32 %v1382, %v1383
    %v1385 = vand.u32 %v1384, 4294901760
    %1386 = vmatpush1.msra.mxu0 %v1385
    %1387 = vmatprep.subr.mxu0 0.0
    %1388 = vmatpush2.msra.mxu0 0.0
    %1389 = vmatprep.subr.mxu0 0.0
    %1390 = vmatpush2.msra.mxu0 0.0
    %1391 = vmatprep.subr.mxu0 0.0
    %1392 = vmatpush2.msra.mxu0 0.0
    %1393 = vmatprep.subr.mxu0 0.0
    %1394 = vmatpush2.msra.mxu0 0.0
    %1395 = vmatprep.subr.mxu0 0.0
    %1396 = vmatpush2.msra.mxu0 0.0
    %1397 = vmatprep.subr.mxu0 0.0
    %1398 = vmatpush2.msra.mxu0 0.0
    %1399 = vmatprep.subr.mxu0 0.0
    %1400 = vmatpush2.msra.mxu0 0.0
    %1401 = vmatprep.subr.mxu0 0.0
    %1402 = vmatpush2.msra.mxu0 0.0
    %1403 = vmatprep.subr.mxu0 0.0
    %1404 = vmatpush2.msra.mxu0 0.0
    %1405 = vmatprep.subr.mxu0 0.0
    %1406 = vmatpush2.msra.mxu0 0.0
    %1407 = vmatprep.subr.mxu0 0.0
    %1408 = vmatpush2.msra.mxu0 0.0
    %1409 = vmatprep.subr.mxu0 0.0
    %1410 = vmatpush2.msra.mxu0 0.0
    %1411 = vmatprep.subr.mxu0 0.0
    %1412 = vmatpush2.msra.mxu0 0.0
    %1413 = vmatprep.subr.mxu0 0.0
    %1414 = vmatpush2.msra.mxu0 0.0
    %1415 = vmatprep.subr.mxu0 0.0
    %1416 = vmatpush2.msra.mxu0 0.0
    %1417 = vmatprep.subr.mxu0 0.0
    %1418 = vmatpush2.msra.mxu0 0.0
    %1419 = vmatprep.mubr.f32.mxu0 0.0
    %v1420 = vand.u32 %v1162, 4294901760
    %1421 = vmatmul.mubr.f32.gmra.mxu0 %v1420
    %v1422 = vpop.f32.mrf.mxu0
    %v1423 = vadd.f32 %v1272, %v1422
    %v1424 = vpop.f32.mrf.mxu0
    %1425 = vdwg.mxu0
    %1426 = vmatprep.subr.mxu0 0.0
    %v1427 = vand.u32 %v1178, 4294901760
    %v1428 = vsub.f32 %v1178, %v1427
    %1429 = vmatpush1.msra.mxu0 %v1428
    %1430 = vmatprep.subr.mxu0 0.0
    %v1431 = vand.u32 %v1177, 4294901760
    %v1432 = vsub.f32 %v1177, %v1431
    %1433 = vmatpush1.msra.mxu0 %v1432
    %1434 = vmatprep.subr.mxu0 0.0
    %v1435 = vand.u32 %v1176, 4294901760
    %v1436 = vsub.f32 %v1176, %v1435
    %1437 = vmatpush1.msra.mxu0 %v1436
    %1438 = vmatprep.subr.mxu0 0.0
    %v1439 = vand.u32 %v1175, 4294901760
    %v1440 = vsub.f32 %v1175, %v1439
    %1441 = vmatpush1.msra.mxu0 %v1440
    %1442 = vmatprep.subr.mxu0 0.0
    %v1443 = vand.u32 %v1174, 4294901760
    %v1444 = vsub.f32 %v1174, %v1443
    %1445 = vmatpush1.msra.mxu0 %v1444
    %1446 = vmatprep.subr.mxu0 0.0
    %v1447 = vand.u32 %v1173, 4294901760
    %v1448 = vsub.f32 %v1173, %v1447
    %1449 = vmatpush1.msra.mxu0 %v1448
    %1450 = vmatprep.subr.mxu0 0.0
    %v1451 = vand.u32 %v1172, 4294901760
    %v1452 = vsub.f32 %v1172, %v1451
    %1453 = vmatpush1.msra.mxu0 %v1452
    %1454 = vmatprep.subr.mxu0 0.0
    %v1455 = vand.u32 %v1171, 4294901760
    %v1456 = vsub.f32 %v1171, %v1455
    %1457 = vmatpush1.msra.mxu0 %v1456
    %1458 = vmatprep.subr.mxu0 0.0
    %v1459 = vand.u32 %v1170, 4294901760
    %v1460 = vsub.f32 %v1170, %v1459
    %1461 = vmatpush1.msra.mxu0 %v1460
    %1462 = vmatprep.subr.mxu0 0.0
    %v1463 = vand.u32 %v1169, 4294901760
    %v1464 = vsub.f32 %v1169, %v1463
    %1465 = vmatpush1.msra.mxu0 %v1464
    %1466 = vmatprep.subr.mxu0 0.0
    %v1467 = vand.u32 %v1168, 4294901760
    %v1468 = vsub.f32 %v1168, %v1467
    %1469 = vmatpush1.msra.mxu0 %v1468
    %1470 = vmatprep.subr.mxu0 0.0
    %v1471 = vand.u32 %v1167, 4294901760
    %v1472 = vsub.f32 %v1167, %v1471
    %1473 = vmatpush1.msra.mxu0 %v1472
    %1474 = vmatprep.subr.mxu0 0.0
    %v1475 = vand.u32 %v1166, 4294901760
    %v1476 = vsub.f32 %v1166, %v1475
    %1477 = vmatpush1.msra.mxu0 %v1476
    %1478 = vmatprep.subr.mxu0 0.0
    %v1479 = vand.u32 %v1165, 4294901760
    %v1480 = vsub.f32 %v1165, %v1479
    %1481 = vmatpush1.msra.mxu0 %v1480
    %1482 = vmatprep.subr.mxu0 0.0
    %v1483 = vand.u32 %v1164, 4294901760
    %v1484 = vsub.f32 %v1164, %v1483
    %1485 = vmatpush1.msra.mxu0 %v1484
    %1486 = vmatprep.subr.mxu0 0.0
    %v1487 = vand.u32 %v1163, 4294901760
    %v1488 = vsub.f32 %v1163, %v1487
    %1489 = vmatpush1.msra.mxu0 %v1488
    %1490 = vmatprep.subr.mxu0 0.0
    %1491 = vmatpush2.msra.mxu0 0.0
    %1492 = vmatprep.subr.mxu0 0.0
    %1493 = vmatpush2.msra.mxu0 0.0
    %1494 = vmatprep.subr.mxu0 0.0
    %1495 = vmatpush2.msra.mxu0 0.0
    %1496 = vmatprep.subr.mxu0 0.0
    %1497 = vmatpush2.msra.mxu0 0.0
    %1498 = vmatprep.subr.mxu0 0.0
    %1499 = vmatpush2.msra.mxu0 0.0
    %1500 = vmatprep.subr.mxu0 0.0
    %1501 = vmatpush2.msra.mxu0 0.0
    %1502 = vmatprep.subr.mxu0 0.0
    %1503 = vmatpush2.msra.mxu0 0.0
    %1504 = vmatprep.subr.mxu0 0.0
    %1505 = vmatpush2.msra.mxu0 0.0
    %1506 = vmatprep.subr.mxu0 0.0
    %1507 = vmatpush2.msra.mxu0 0.0
    %1508 = vmatprep.subr.mxu0 0.0
    %1509 = vmatpush2.msra.mxu0 0.0
    %1510 = vmatprep.subr.mxu0 0.0
    %1511 = vmatpush2.msra.mxu0 0.0
    %1512 = vmatprep.subr.mxu0 0.0
    %1513 = vmatpush2.msra.mxu0 0.0
    %1514 = vmatprep.subr.mxu0 0.0
    %1515 = vmatpush2.msra.mxu0 0.0
    %1516 = vmatprep.subr.mxu0 0.0
    %1517 = vmatpush2.msra.mxu0 0.0
    %1518 = vmatprep.subr.mxu0 0.0
    %1519 = vmatpush2.msra.mxu0 0.0
    %1520 = vmatprep.subr.mxu0 0.0
    %1521 = vmatpush2.msra.mxu0 0.0
    %1522 = vmatprep.mubr.f32.mxu0 0.0
    %v1523 = vand.u32 %v1162, 4294901760
    %v1524 = vsub.f32 %v1162, %v1523
    %1525 = vmatmul.mubr.f32.gmra.mxu0 %v1524
    %v1526 = vpop.f32.mrf.mxu0
    %v1527 = vadd.f32 %v1423, %v1526
    %v1528 = vpop.f32.mrf.mxu0
    %1529 = vdwg.mxu0
    %1530 = vmatprep.subr.mxu0 0.0
    %v1531 = vand.u32 %v1178, 4294901760
    %1532 = vmatpush1.msra.mxu0 %v1531
    %1533 = vmatprep.subr.mxu0 0.0
    %v1534 = vand.u32 %v1177, 4294901760
    %1535 = vmatpush1.msra.mxu0 %v1534
    %1536 = vmatprep.subr.mxu0 0.0
    %v1537 = vand.u32 %v1176, 4294901760
    %1538 = vmatpush1.msra.mxu0 %v1537
    %1539 = vmatprep.subr.mxu0 0.0
    %v1540 = vand.u32 %v1175, 4294901760
    %1541 = vmatpush1.msra.mxu0 %v1540
    %1542 = vmatprep.subr.mxu0 0.0
    %v1543 = vand.u32 %v1174, 4294901760
    %1544 = vmatpush1.msra.mxu0 %v1543
    %1545 = vmatprep.subr.mxu0 0.0
    %v1546 = vand.u32 %v1173, 4294901760
    %1547 = vmatpush1.msra.mxu0 %v1546
    %1548 = vmatprep.subr.mxu0 0.0
    %v1549 = vand.u32 %v1172, 4294901760
    %1550 = vmatpush1.msra.mxu0 %v1549
    %1551 = vmatprep.subr.mxu0 0.0
    %v1552 = vand.u32 %v1171, 4294901760
    %1553 = vmatpush1.msra.mxu0 %v1552
    %1554 = vmatprep.subr.mxu0 0.0
    %v1555 = vand.u32 %v1170, 4294901760
    %1556 = vmatpush1.msra.mxu0 %v1555
    %1557 = vmatprep.subr.mxu0 0.0
    %v1558 = vand.u32 %v1169, 4294901760
    %1559 = vmatpush1.msra.mxu0 %v1558
    %1560 = vmatprep.subr.mxu0 0.0
    %v1561 = vand.u32 %v1168, 4294901760
    %1562 = vmatpush1.msra.mxu0 %v1561
    %1563 = vmatprep.subr.mxu0 0.0
    %v1564 = vand.u32 %v1167, 4294901760
    %1565 = vmatpush1.msra.mxu0 %v1564
    %1566 = vmatprep.subr.mxu0 0.0
    %v1567 = vand.u32 %v1166, 4294901760
    %1568 = vmatpush1.msra.mxu0 %v1567
    %1569 = vmatprep.subr.mxu0 0.0
    %v1570 = vand.u32 %v1165, 4294901760
    %1571 = vmatpush1.msra.mxu0 %v1570
    %1572 = vmatprep.subr.mxu0 0.0
    %v1573 = vand.u32 %v1164, 4294901760
    %1574 = vmatpush1.msra.mxu0 %v1573
    %1575 = vmatprep.subr.mxu0 0.0
    %v1576 = vand.u32 %v1163, 4294901760
    %1577 = vmatpush1.msra.mxu0 %v1576
    %1578 = vmatprep.subr.mxu0 0.0
    %1579 = vmatpush2.msra.mxu0 0.0
    %1580 = vmatprep.subr.mxu0 0.0
    %1581 = vmatpush2.msra.mxu0 0.0
    %1582 = vmatprep.subr.mxu0 0.0
    %1583 = vmatpush2.msra.mxu0 0.0
    %1584 = vmatprep.subr.mxu0 0.0
    %1585 = vmatpush2.msra.mxu0 0.0
    %1586 = vmatprep.subr.mxu0 0.0
    %1587 = vmatpush2.msra.mxu0 0.0
    %1588 = vmatprep.subr.mxu0 0.0
    %1589 = vmatpush2.msra.mxu0 0.0
    %1590 = vmatprep.subr.mxu0 0.0
    %1591 = vmatpush2.msra.mxu0 0.0
    %1592 = vmatprep.subr.mxu0 0.0
    %1593 = vmatpush2.msra.mxu0 0.0
    %1594 = vmatprep.subr.mxu0 0.0
    %1595 = vmatpush2.msra.mxu0 0.0
    %1596 = vmatprep.subr.mxu0 0.0
    %1597 = vmatpush2.msra.mxu0 0.0
    %1598 = vmatprep.subr.mxu0 0.0
    %1599 = vmatpush2.msra.mxu0 0.0
    %1600 = vmatprep.subr.mxu0 0.0
    %1601 = vmatpush2.msra.mxu0 0.0
    %1602 = vmatprep.subr.mxu0 0.0
    %1603 = vmatpush2.msra.mxu0 0.0
    %1604 = vmatprep.subr.mxu0 0.0
    %1605 = vmatpush2.msra.mxu0 0.0
    %1606 = vmatprep.subr.mxu0 0.0
    %1607 = vmatpush2.msra.mxu0 0.0
    %1608 = vmatprep.subr.mxu0 0.0
    %1609 = vmatpush2.msra.mxu0 0.0
    %1610 = vmatprep.mubr.f32.mxu0 0.0
    %v1611 = vand.u32 %v1162, 4294901760
    %v1612 = vsub.f32 %v1162, %v1611
    %v1613 = vand.u32 %v1612, 4294901760
    %1614 = vmatmul.mubr.f32.gmra.mxu0 %v1613
    %v1615 = vpop.f32.mrf.mxu0
    %v1616 = vadd.f32 %v1527, %v1615
    %v1617 = vpop.f32.mrf.mxu0
    %1618 = vdwg.mxu0
    %1619 = vmatprep.subr.mxu0 0.0
    %v1620 = vand.u32 %v1178, 4294901760
    %v1621 = vsub.f32 %v1178, %v1620
    %v1622 = vand.u32 %v1621, 4294901760
    %1623 = vmatpush1.msra.mxu0 %v1622
    %1624 = vmatprep.subr.mxu0 0.0
    %v1625 = vand.u32 %v1177, 4294901760
    %v1626 = vsub.f32 %v1177, %v1625
    %v1627 = vand.u32 %v1626, 4294901760
    %1628 = vmatpush1.msra.mxu0 %v1627
    %1629 = vmatprep.subr.mxu0 0.0
    %v1630 = vand.u32 %v1176, 4294901760
    %v1631 = vsub.f32 %v1176, %v1630
    %v1632 = vand.u32 %v1631, 4294901760
    %1633 = vmatpush1.msra.mxu0 %v1632
    %1634 = vmatprep.subr.mxu0 0.0
    %v1635 = vand.u32 %v1175, 4294901760
    %v1636 = vsub.f32 %v1175, %v1635
    %v1637 = vand.u32 %v1636, 4294901760
    %1638 = vmatpush1.msra.mxu0 %v1637
    %1639 = vmatprep.subr.mxu0 0.0
    %v1640 = vand.u32 %v1174, 4294901760
    %v1641 = vsub.f32 %v1174, %v1640
    %v1642 = vand.u32 %v1641, 4294901760
    %1643 = vmatpush1.msra.mxu0 %v1642
    %1644 = vmatprep.subr.mxu0 0.0
    %v1645 = vand.u32 %v1173, 4294901760
    %v1646 = vsub.f32 %v1173, %v1645
    %v1647 = vand.u32 %v1646, 4294901760
    %1648 = vmatpush1.msra.mxu0 %v1647
    %1649 = vmatprep.subr.mxu0 0.0
    %v1650 = vand.u32 %v1172, 4294901760
    %v1651 = vsub.f32 %v1172, %v1650
    %v1652 = vand.u32 %v1651, 4294901760
    %1653 = vmatpush1.msra.mxu0 %v1652
    %1654 = vmatprep.subr.mxu0 0.0
    %v1655 = vand.u32 %v1171, 4294901760
    %v1656 = vsub.f32 %v1171, %v1655
    %v1657 = vand.u32 %v1656, 4294901760
    %1658 = vmatpush1.msra.mxu0 %v1657
    %1659 = vmatprep.subr.mxu0 0.0
    %v1660 = vand.u32 %v1170, 4294901760
    %v1661 = vsub.f32 %v1170, %v1660
    %v1662 = vand.u32 %v1661, 4294901760
    %1663 = vmatpush1.msra.mxu0 %v1662
    %1664 = vmatprep.subr.mxu0 0.0
    %v1665 = vand.u32 %v1169, 4294901760
    %v1666 = vsub.f32 %v1169, %v1665
    %v1667 = vand.u32 %v1666, 4294901760
    %1668 = vmatpush1.msra.mxu0 %v1667
    %1669 = vmatprep.subr.mxu0 0.0
    %v1670 = vand.u32 %v1168, 4294901760
    %v1671 = vsub.f32 %v1168, %v1670
    %v1672 = vand.u32 %v1671, 4294901760
    %1673 = vmatpush1.msra.mxu0 %v1672
    %1674 = vmatprep.subr.mxu0 0.0
    %v1675 = vand.u32 %v1167, 4294901760
    %v1676 = vsub.f32 %v1167, %v1675
    %v1677 = vand.u32 %v1676, 4294901760
    %1678 = vmatpush1.msra.mxu0 %v1677
    %1679 = vmatprep.subr.mxu0 0.0
    %v1680 = vand.u32 %v1166, 4294901760
    %v1681 = vsub.f32 %v1166, %v1680
    %v1682 = vand.u32 %v1681, 4294901760
    %1683 = vmatpush1.msra.mxu0 %v1682
    %1684 = vmatprep.subr.mxu0 0.0
    %v1685 = vand.u32 %v1165, 4294901760
    %v1686 = vsub.f32 %v1165, %v1685
    %v1687 = vand.u32 %v1686, 4294901760
    %1688 = vmatpush1.msra.mxu0 %v1687
    %1689 = vmatprep.subr.mxu0 0.0
    %v1690 = vand.u32 %v1164, 4294901760
    %v1691 = vsub.f32 %v1164, %v1690
    %v1692 = vand.u32 %v1691, 4294901760
    %1693 = vmatpush1.msra.mxu0 %v1692
    %1694 = vmatprep.subr.mxu0 0.0
    %v1695 = vand.u32 %v1163, 4294901760
    %v1696 = vsub.f32 %v1163, %v1695
    %v1697 = vand.u32 %v1696, 4294901760
    %1698 = vmatpush1.msra.mxu0 %v1697
    %1699 = vmatprep.subr.mxu0 0.0
    %1700 = vmatpush2.msra.mxu0 0.0
    %1701 = vmatprep.subr.mxu0 0.0
    %1702 = vmatpush2.msra.mxu0 0.0
    %1703 = vmatprep.subr.mxu0 0.0
    %1704 = vmatpush2.msra.mxu0 0.0
    %1705 = vmatprep.subr.mxu0 0.0
    %1706 = vmatpush2.msra.mxu0 0.0
    %1707 = vmatprep.subr.mxu0 0.0
    %1708 = vmatpush2.msra.mxu0 0.0
    %1709 = vmatprep.subr.mxu0 0.0
    %1710 = vmatpush2.msra.mxu0 0.0
    %1711 = vmatprep.subr.mxu0 0.0
    %1712 = vmatpush2.msra.mxu0 0.0
    %1713 = vmatprep.subr.mxu0 0.0
    %1714 = vmatpush2.msra.mxu0 0.0
    %1715 = vmatprep.subr.mxu0 0.0
    %1716 = vmatpush2.msra.mxu0 0.0
    %1717 = vmatprep.subr.mxu0 0.0
    %1718 = vmatpush2.msra.mxu0 0.0
    %1719 = vmatprep.subr.mxu0 0.0
    %1720 = vmatpush2.msra.mxu0 0.0
    %1721 = vmatprep.subr.mxu0 0.0
    %1722 = vmatpush2.msra.mxu0 0.0
    %1723 = vmatprep.subr.mxu0 0.0
    %1724 = vmatpush2.msra.mxu0 0.0
    %1725 = vmatprep.subr.mxu0 0.0
    %1726 = vmatpush2.msra.mxu0 0.0
    %1727 = vmatprep.subr.mxu0 0.0
    %1728 = vmatpush2.msra.mxu0 0.0
    %1729 = vmatprep.subr.mxu0 0.0
    %1730 = vmatpush2.msra.mxu0 0.0
    %1731 = vmatprep.mubr.f32.mxu0 0.0
    %v1732 = vand.u32 %v1162, 4294901760
    %1733 = vmatmul.mubr.f32.gmra.mxu0 %v1732
    %v1734 = vpop.f32.mrf.mxu0
    %v1735 = vadd.f32 %v1616, %v1734
    %v1736 = vpop.f32.mrf.mxu0
    %1737 = vdwg.mxu0
    %1738 = vmatprep.subr.mxu0 0.0
    %v1739 = vand.u32 %v1178, 4294901760
    %1740 = vmatpush1.msra.mxu0 %v1739
    %1741 = vmatprep.subr.mxu0 0.0
    %v1742 = vand.u32 %v1177, 4294901760
    %1743 = vmatpush1.msra.mxu0 %v1742
    %1744 = vmatprep.subr.mxu0 0.0
    %v1745 = vand.u32 %v1176, 4294901760
    %1746 = vmatpush1.msra.mxu0 %v1745
    %1747 = vmatprep.subr.mxu0 0.0
    %v1748 = vand.u32 %v1175, 4294901760
    %1749 = vmatpush1.msra.mxu0 %v1748
    %1750 = vmatprep.subr.mxu0 0.0
    %v1751 = vand.u32 %v1174, 4294901760
    %1752 = vmatpush1.msra.mxu0 %v1751
    %1753 = vmatprep.subr.mxu0 0.0
    %v1754 = vand.u32 %v1173, 4294901760
    %1755 = vmatpush1.msra.mxu0 %v1754
    %1756 = vmatprep.subr.mxu0 0.0
    %v1757 = vand.u32 %v1172, 4294901760
    %1758 = vmatpush1.msra.mxu0 %v1757
    %1759 = vmatprep.subr.mxu0 0.0
    %v1760 = vand.u32 %v1171, 4294901760
    %1761 = vmatpush1.msra.mxu0 %v1760
    %1762 = vmatprep.subr.mxu0 0.0
    %v1763 = vand.u32 %v1170, 4294901760
    %1764 = vmatpush1.msra.mxu0 %v1763
    %1765 = vmatprep.subr.mxu0 0.0
    %v1766 = vand.u32 %v1169, 4294901760
    %1767 = vmatpush1.msra.mxu0 %v1766
    %1768 = vmatprep.subr.mxu0 0.0
    %v1769 = vand.u32 %v1168, 4294901760
    %1770 = vmatpush1.msra.mxu0 %v1769
    %1771 = vmatprep.subr.mxu0 0.0
    %v1772 = vand.u32 %v1167, 4294901760
    %1773 = vmatpush1.msra.mxu0 %v1772
    %1774 = vmatprep.subr.mxu0 0.0
    %v1775 = vand.u32 %v1166, 4294901760
    %1776 = vmatpush1.msra.mxu0 %v1775
    %1777 = vmatprep.subr.mxu0 0.0
    %v1778 = vand.u32 %v1165, 4294901760
    %1779 = vmatpush1.msra.mxu0 %v1778
    %1780 = vmatprep.subr.mxu0 0.0
    %v1781 = vand.u32 %v1164, 4294901760
    %1782 = vmatpush1.msra.mxu0 %v1781
    %1783 = vmatprep.subr.mxu0 0.0
    %v1784 = vand.u32 %v1163, 4294901760
    %1785 = vmatpush1.msra.mxu0 %v1784
    %1786 = vmatprep.subr.mxu0 0.0
    %1787 = vmatpush2.msra.mxu0 0.0
    %1788 = vmatprep.subr.mxu0 0.0
    %1789 = vmatpush2.msra.mxu0 0.0
    %1790 = vmatprep.subr.mxu0 0.0
    %1791 = vmatpush2.msra.mxu0 0.0
    %1792 = vmatprep.subr.mxu0 0.0
    %1793 = vmatpush2.msra.mxu0 0.0
    %1794 = vmatprep.subr.mxu0 0.0
    %1795 = vmatpush2.msra.mxu0 0.0
    %1796 = vmatprep.subr.mxu0 0.0
    %1797 = vmatpush2.msra.mxu0 0.0
    %1798 = vmatprep.subr.mxu0 0.0
    %1799 = vmatpush2.msra.mxu0 0.0
    %1800 = vmatprep.subr.mxu0 0.0
    %1801 = vmatpush2.msra.mxu0 0.0
    %1802 = vmatprep.subr.mxu0 0.0
    %1803 = vmatpush2.msra.mxu0 0.0
    %1804 = vmatprep.subr.mxu0 0.0
    %1805 = vmatpush2.msra.mxu0 0.0
    %1806 = vmatprep.subr.mxu0 0.0
    %1807 = vmatpush2.msra.mxu0 0.0
    %1808 = vmatprep.subr.mxu0 0.0
    %1809 = vmatpush2.msra.mxu0 0.0
    %1810 = vmatprep.subr.mxu0 0.0
    %1811 = vmatpush2.msra.mxu0 0.0
    %1812 = vmatprep.subr.mxu0 0.0
    %1813 = vmatpush2.msra.mxu0 0.0
    %1814 = vmatprep.subr.mxu0 0.0
    %1815 = vmatpush2.msra.mxu0 0.0
    %1816 = vmatprep.subr.mxu0 0.0
    %1817 = vmatpush2.msra.mxu0 0.0
    %1818 = vmatprep.mubr.f32.mxu0 0.0
    %v1819 = vand.u32 %v1162, 4294901760
    %1820 = vmatmul.mubr.f32.gmra.mxu0 %v1819
    %v1821 = vpop.f32.mrf.mxu0
    %v1822 = vadd.f32 %v1735, %v1821
    %v1823 = vpop.f32.mrf.mxu0
    %1824 = vdwg.mxu0
    %v1825 = vmax.f32 %v1822, 0.0
    %v1826 = vld [vmem:[#allocation2 + $0x120] sm:$0xff]
    %v1827 = vld [vmem:[#allocation2 + $0x128] sm:$0xff]
    %v1828 = vld [vmem:[#allocation2 + $0x130] sm:$0xff]
    %v1829 = vld [vmem:[#allocation2 + $0x138] sm:$0xff]
    %v1830 = vld [vmem:[#allocation2 + $0x140] sm:$0xff]
    %v1831 = vld [vmem:[#allocation2 + $0x148] sm:$0xff]
    %v1832 = vld [vmem:[#allocation2 + $0x150] sm:$0xff]
    %v1833 = vld [vmem:[#allocation2 + $0x158] sm:$0xff]
    %v1834 = vld [vmem:[#allocation2 + $0x160] sm:$0xff]
    %v1835 = vld [vmem:[#allocation2 + $0x168] sm:$0xff]
    %v1836 = vld [vmem:[#allocation2 + $0x170] sm:$0xff]
    %v1837 = vld [vmem:[#allocation2 + $0x178] sm:$0xff]
    %v1838 = vld [vmem:[#allocation2 + $0x180] sm:$0xff]
    %v1839 = vld [vmem:[#allocation2 + $0x188] sm:$0xff]
    %v1840 = vld [vmem:[#allocation2 + $0x190] sm:$0xff]
    %v1841 = vld [vmem:[#allocation2 + $0x198] sm:$0xff]
    %v1842 = vld [vmem:[#allocation2 + $0x1a0] sm:$0x1]
    %v1843 = vlaneseq
    %v1844 = vshrl.u32 %v1843, 7
    %v1845 = vsub.s32 0, %v1844
    %v1846 = vrot.slane %v1842, %v1845
    %1847 = vmatprep.subr.mxu0 0.0
    %v1848 = vand.u32 %v1841, 4294901760
    %1849 = vmatpush1.msra.mxu0 %v1848
    %1850 = vmatprep.subr.mxu0 0.0
    %v1851 = vand.u32 %v1840, 4294901760
    %1852 = vmatpush1.msra.mxu0 %v1851
    %1853 = vmatprep.subr.mxu0 0.0
    %v1854 = vand.u32 %v1839, 4294901760
    %1855 = vmatpush1.msra.mxu0 %v1854
    %1856 = vmatprep.subr.mxu0 0.0
    %v1857 = vand.u32 %v1838, 4294901760
    %1858 = vmatpush1.msra.mxu0 %v1857
    %1859 = vmatprep.subr.mxu0 0.0
    %v1860 = vand.u32 %v1837, 4294901760
    %1861 = vmatpush1.msra.mxu0 %v1860
    %1862 = vmatprep.subr.mxu0 0.0
    %v1863 = vand.u32 %v1836, 4294901760
    %1864 = vmatpush1.msra.mxu0 %v1863
    %1865 = vmatprep.subr.mxu0 0.0
    %v1866 = vand.u32 %v1835, 4294901760
    %1867 = vmatpush1.msra.mxu0 %v1866
    %1868 = vmatprep.subr.mxu0 0.0
    %v1869 = vand.u32 %v1834, 4294901760
    %1870 = vmatpush1.msra.mxu0 %v1869
    %1871 = vmatprep.subr.mxu0 0.0
    %v1872 = vand.u32 %v1833, 4294901760
    %1873 = vmatpush1.msra.mxu0 %v1872
    %1874 = vmatprep.subr.mxu0 0.0
    %v1875 = vand.u32 %v1832, 4294901760
    %1876 = vmatpush1.msra.mxu0 %v1875
    %1877 = vmatprep.subr.mxu0 0.0
    %v1878 = vand.u32 %v1831, 4294901760
    %1879 = vmatpush1.msra.mxu0 %v1878
    %1880 = vmatprep.subr.mxu0 0.0
    %v1881 = vand.u32 %v1830, 4294901760
    %1882 = vmatpush1.msra.mxu0 %v1881
    %1883 = vmatprep.subr.mxu0 0.0
    %v1884 = vand.u32 %v1829, 4294901760
    %1885 = vmatpush1.msra.mxu0 %v1884
    %1886 = vmatprep.subr.mxu0 0.0
    %v1887 = vand.u32 %v1828, 4294901760
    %1888 = vmatpush1.msra.mxu0 %v1887
    %1889 = vmatprep.subr.mxu0 0.0
    %v1890 = vand.u32 %v1827, 4294901760
    %1891 = vmatpush1.msra.mxu0 %v1890
    %1892 = vmatprep.subr.mxu0 0.0
    %v1893 = vand.u32 %v1826, 4294901760
    %1894 = vmatpush1.msra.mxu0 %v1893
    %1895 = vmatprep.subr.mxu0 0.0
    %1896 = vmatpush2.msra.mxu0 0.0
    %1897 = vmatprep.subr.mxu0 0.0
    %1898 = vmatpush2.msra.mxu0 0.0
    %1899 = vmatprep.subr.mxu0 0.0
    %1900 = vmatpush2.msra.mxu0 0.0
    %1901 = vmatprep.subr.mxu0 0.0
    %1902 = vmatpush2.msra.mxu0 0.0
    %1903 = vmatprep.subr.mxu0 0.0
    %1904 = vmatpush2.msra.mxu0 0.0
    %1905 = vmatprep.subr.mxu0 0.0
    %1906 = vmatpush2.msra.mxu0 0.0
    %1907 = vmatprep.subr.mxu0 0.0
    %1908 = vmatpush2.msra.mxu0 0.0
    %1909 = vmatprep.subr.mxu0 0.0
    %1910 = vmatpush2.msra.mxu0 0.0
    %1911 = vmatprep.subr.mxu0 0.0
    %1912 = vmatpush2.msra.mxu0 0.0
    %1913 = vmatprep.subr.mxu0 0.0
    %1914 = vmatpush2.msra.mxu0 0.0
    %1915 = vmatprep.subr.mxu0 0.0
    %1916 = vmatpush2.msra.mxu0 0.0
    %1917 = vmatprep.subr.mxu0 0.0
    %1918 = vmatpush2.msra.mxu0 0.0
    %1919 = vmatprep.subr.mxu0 0.0
    %1920 = vmatpush2.msra.mxu0 0.0
    %1921 = vmatprep.subr.mxu0 0.0
    %1922 = vmatpush2.msra.mxu0 0.0
    %1923 = vmatprep.subr.mxu0 0.0
    %1924 = vmatpush2.msra.mxu0 0.0
    %1925 = vmatprep.subr.mxu0 0.0
    %1926 = vmatpush2.msra.mxu0 0.0
    %1927 = vmatprep.mubr.f32.mxu0 0.0
    %v1928 = vand.u32 %v1825, 4294901760
    %v1929 = vsub.f32 %v1825, %v1928
    %v1930 = vand.u32 %v1929, 4294901760
    %v1931 = vsub.f32 %v1929, %v1930
    %v1932 = vand.u32 %v1931, 4294901760
    %1933 = vmatmul.mubr.f32.gmra.mxu0 %v1932
    %v1934 = vpop.f32.mrf.mxu0
    %v1935 = vadd.f32 %v1846, %v1934
    %v1936 = vpop.f32.mrf.mxu0
    %1937 = vdwg.mxu0
    %1938 = vmatprep.subr.mxu0 0.0
    %v1939 = vand.u32 %v1841, 4294901760
    %v1940 = vsub.f32 %v1841, %v1939
    %v1941 = vand.u32 %v1940, 4294901760
    %v1942 = vsub.f32 %v1940, %v1941
    %v1943 = vand.u32 %v1942, 4294901760
    %1944 = vmatpush1.msra.mxu0 %v1943
    %1945 = vmatprep.subr.mxu0 0.0
    %v1946 = vand.u32 %v1840, 4294901760
    %v1947 = vsub.f32 %v1840, %v1946
    %v1948 = vand.u32 %v1947, 4294901760
    %v1949 = vsub.f32 %v1947, %v1948
    %v1950 = vand.u32 %v1949, 4294901760
    %1951 = vmatpush1.msra.mxu0 %v1950
    %1952 = vmatprep.subr.mxu0 0.0
    %v1953 = vand.u32 %v1839, 4294901760
    %v1954 = vsub.f32 %v1839, %v1953
    %v1955 = vand.u32 %v1954, 4294901760
    %v1956 = vsub.f32 %v1954, %v1955
    %v1957 = vand.u32 %v1956, 4294901760
    %1958 = vmatpush1.msra.mxu0 %v1957
    %1959 = vmatprep.subr.mxu0 0.0
    %v1960 = vand.u32 %v1838, 4294901760
    %v1961 = vsub.f32 %v1838, %v1960
    %v1962 = vand.u32 %v1961, 4294901760
    %v1963 = vsub.f32 %v1961, %v1962
    %v1964 = vand.u32 %v1963, 4294901760
    %1965 = vmatpush1.msra.mxu0 %v1964
    %1966 = vmatprep.subr.mxu0 0.0
    %v1967 = vand.u32 %v1837, 4294901760
    %v1968 = vsub.f32 %v1837, %v1967
    %v1969 = vand.u32 %v1968, 4294901760
    %v1970 = vsub.f32 %v1968, %v1969
    %v1971 = vand.u32 %v1970, 4294901760
    %1972 = vmatpush1.msra.mxu0 %v1971
    %1973 = vmatprep.subr.mxu0 0.0
    %v1974 = vand.u32 %v1836, 4294901760
    %v1975 = vsub.f32 %v1836, %v1974
    %v1976 = vand.u32 %v1975, 4294901760
    %v1977 = vsub.f32 %v1975, %v1976
    %v1978 = vand.u32 %v1977, 4294901760
    %1979 = vmatpush1.msra.mxu0 %v1978
    %1980 = vmatprep.subr.mxu0 0.0
    %v1981 = vand.u32 %v1835, 4294901760
    %v1982 = vsub.f32 %v1835, %v1981
    %v1983 = vand.u32 %v1982, 4294901760
    %v1984 = vsub.f32 %v1982, %v1983
    %v1985 = vand.u32 %v1984, 4294901760
    %1986 = vmatpush1.msra.mxu0 %v1985
    %1987 = vmatprep.subr.mxu0 0.0
    %v1988 = vand.u32 %v1834, 4294901760
    %v1989 = vsub.f32 %v1834, %v1988
    %v1990 = vand.u32 %v1989, 4294901760
    %v1991 = vsub.f32 %v1989, %v1990
    %v1992 = vand.u32 %v1991, 4294901760
    %1993 = vmatpush1.msra.mxu0 %v1992
    %1994 = vmatprep.subr.mxu0 0.0
    %v1995 = vand.u32 %v1833, 4294901760
    %v1996 = vsub.f32 %v1833, %v1995
    %v1997 = vand.u32 %v1996, 4294901760
    %v1998 = vsub.f32 %v1996, %v1997
    %v1999 = vand.u32 %v1998, 4294901760
    %2000 = vmatpush1.msra.mxu0 %v1999
    %2001 = vmatprep.subr.mxu0 0.0
    %v2002 = vand.u32 %v1832, 4294901760
    %v2003 = vsub.f32 %v1832, %v2002
    %v2004 = vand.u32 %v2003, 4294901760
    %v2005 = vsub.f32 %v2003, %v2004
    %v2006 = vand.u32 %v2005, 4294901760
    %2007 = vmatpush1.msra.mxu0 %v2006
    %2008 = vmatprep.subr.mxu0 0.0
    %v2009 = vand.u32 %v1831, 4294901760
    %v2010 = vsub.f32 %v1831, %v2009
    %v2011 = vand.u32 %v2010, 4294901760
    %v2012 = vsub.f32 %v2010, %v2011
    %v2013 = vand.u32 %v2012, 4294901760
    %2014 = vmatpush1.msra.mxu0 %v2013
    %2015 = vmatprep.subr.mxu0 0.0
    %v2016 = vand.u32 %v1830, 4294901760
    %v2017 = vsub.f32 %v1830, %v2016
    %v2018 = vand.u32 %v2017, 4294901760
    %v2019 = vsub.f32 %v2017, %v2018
    %v2020 = vand.u32 %v2019, 4294901760
    %2021 = vmatpush1.msra.mxu0 %v2020
    %2022 = vmatprep.subr.mxu0 0.0
    %v2023 = vand.u32 %v1829, 4294901760
    %v2024 = vsub.f32 %v1829, %v2023
    %v2025 = vand.u32 %v2024, 4294901760
    %v2026 = vsub.f32 %v2024, %v2025
    %v2027 = vand.u32 %v2026, 4294901760
    %2028 = vmatpush1.msra.mxu0 %v2027
    %2029 = vmatprep.subr.mxu0 0.0
    %v2030 = vand.u32 %v1828, 4294901760
    %v2031 = vsub.f32 %v1828, %v2030
    %v2032 = vand.u32 %v2031, 4294901760
    %v2033 = vsub.f32 %v2031, %v2032
    %v2034 = vand.u32 %v2033, 4294901760
    %2035 = vmatpush1.msra.mxu0 %v2034
    %2036 = vmatprep.subr.mxu0 0.0
    %v2037 = vand.u32 %v1827, 4294901760
    %v2038 = vsub.f32 %v1827, %v2037
    %v2039 = vand.u32 %v2038, 4294901760
    %v2040 = vsub.f32 %v2038, %v2039
    %v2041 = vand.u32 %v2040, 4294901760
    %2042 = vmatpush1.msra.mxu0 %v2041
    %2043 = vmatprep.subr.mxu0 0.0
    %v2044 = vand.u32 %v1826, 4294901760
    %v2045 = vsub.f32 %v1826, %v2044
    %v2046 = vand.u32 %v2045, 4294901760
    %v2047 = vsub.f32 %v2045, %v2046
    %v2048 = vand.u32 %v2047, 4294901760
    %2049 = vmatpush1.msra.mxu0 %v2048
    %2050 = vmatprep.subr.mxu0 0.0
    %2051 = vmatpush2.msra.mxu0 0.0
    %2052 = vmatprep.subr.mxu0 0.0
    %2053 = vmatpush2.msra.mxu0 0.0
    %2054 = vmatprep.subr.mxu0 0.0
    %2055 = vmatpush2.msra.mxu0 0.0
    %2056 = vmatprep.subr.mxu0 0.0
    %2057 = vmatpush2.msra.mxu0 0.0
    %2058 = vmatprep.subr.mxu0 0.0
    %2059 = vmatpush2.msra.mxu0 0.0
    %2060 = vmatprep.subr.mxu0 0.0
    %2061 = vmatpush2.msra.mxu0 0.0
    %2062 = vmatprep.subr.mxu0 0.0
    %2063 = vmatpush2.msra.mxu0 0.0
    %2064 = vmatprep.subr.mxu0 0.0
    %2065 = vmatpush2.msra.mxu0 0.0
    %2066 = vmatprep.subr.mxu0 0.0
    %2067 = vmatpush2.msra.mxu0 0.0
    %2068 = vmatprep.subr.mxu0 0.0
    %2069 = vmatpush2.msra.mxu0 0.0
    %2070 = vmatprep.subr.mxu0 0.0
    %2071 = vmatpush2.msra.mxu0 0.0
    %2072 = vmatprep.subr.mxu0 0.0
    %2073 = vmatpush2.msra.mxu0 0.0
    %2074 = vmatprep.subr.mxu0 0.0
    %2075 = vmatpush2.msra.mxu0 0.0
    %2076 = vmatprep.subr.mxu0 0.0
    %2077 = vmatpush2.msra.mxu0 0.0
    %2078 = vmatprep.subr.mxu0 0.0
    %2079 = vmatpush2.msra.mxu0 0.0
    %2080 = vmatprep.subr.mxu0 0.0
    %2081 = vmatpush2.msra.mxu0 0.0
    %2082 = vmatprep.mubr.f32.mxu0 0.0
    %v2083 = vand.u32 %v1825, 4294901760
    %2084 = vmatmul.mubr.f32.gmra.mxu0 %v2083
    %v2085 = vpop.f32.mrf.mxu0
    %v2086 = vadd.f32 %v1935, %v2085
    %v2087 = vpop.f32.mrf.mxu0
    %2088 = vdwg.mxu0
    %2089 = vmatprep.subr.mxu0 0.0
    %v2090 = vand.u32 %v1841, 4294901760
    %v2091 = vsub.f32 %v1841, %v2090
    %2092 = vmatpush1.msra.mxu0 %v2091
    %2093 = vmatprep.subr.mxu0 0.0
    %v2094 = vand.u32 %v1840, 4294901760
    %v2095 = vsub.f32 %v1840, %v2094
    %2096 = vmatpush1.msra.mxu0 %v2095
    %2097 = vmatprep.subr.mxu0 0.0
    %v2098 = vand.u32 %v1839, 4294901760
    %v2099 = vsub.f32 %v1839, %v2098
    %2100 = vmatpush1.msra.mxu0 %v2099
    %2101 = vmatprep.subr.mxu0 0.0
    %v2102 = vand.u32 %v1838, 4294901760
    %v2103 = vsub.f32 %v1838, %v2102
    %2104 = vmatpush1.msra.mxu0 %v2103
    %2105 = vmatprep.subr.mxu0 0.0
    %v2106 = vand.u32 %v1837, 4294901760
    %v2107 = vsub.f32 %v1837, %v2106
    %2108 = vmatpush1.msra.mxu0 %v2107
    %2109 = vmatprep.subr.mxu0 0.0
    %v2110 = vand.u32 %v1836, 4294901760
    %v2111 = vsub.f32 %v1836, %v2110
    %2112 = vmatpush1.msra.mxu0 %v2111
    %2113 = vmatprep.subr.mxu0 0.0
    %v2114 = vand.u32 %v1835, 4294901760
    %v2115 = vsub.f32 %v1835, %v2114
    %2116 = vmatpush1.msra.mxu0 %v2115
    %2117 = vmatprep.subr.mxu0 0.0
    %v2118 = vand.u32 %v1834, 4294901760
    %v2119 = vsub.f32 %v1834, %v2118
    %2120 = vmatpush1.msra.mxu0 %v2119
    %2121 = vmatprep.subr.mxu0 0.0
    %v2122 = vand.u32 %v1833, 4294901760
    %v2123 = vsub.f32 %v1833, %v2122
    %2124 = vmatpush1.msra.mxu0 %v2123
    %2125 = vmatprep.subr.mxu0 0.0
    %v2126 = vand.u32 %v1832, 4294901760
    %v2127 = vsub.f32 %v1832, %v2126
    %2128 = vmatpush1.msra.mxu0 %v2127
    %2129 = vmatprep.subr.mxu0 0.0
    %v2130 = vand.u32 %v1831, 4294901760
    %v2131 = vsub.f32 %v1831, %v2130
    %2132 = vmatpush1.msra.mxu0 %v2131
    %2133 = vmatprep.subr.mxu0 0.0
    %v2134 = vand.u32 %v1830, 4294901760
    %v2135 = vsub.f32 %v1830, %v2134
    %2136 = vmatpush1.msra.mxu0 %v2135
    %2137 = vmatprep.subr.mxu0 0.0
    %v2138 = vand.u32 %v1829, 4294901760
    %v2139 = vsub.f32 %v1829, %v2138
    %2140 = vmatpush1.msra.mxu0 %v2139
    %2141 = vmatprep.subr.mxu0 0.0
    %v2142 = vand.u32 %v1828, 4294901760
    %v2143 = vsub.f32 %v1828, %v2142
    %2144 = vmatpush1.msra.mxu0 %v2143
    %2145 = vmatprep.subr.mxu0 0.0
    %v2146 = vand.u32 %v1827, 4294901760
    %v2147 = vsub.f32 %v1827, %v2146
    %2148 = vmatpush1.msra.mxu0 %v2147
    %2149 = vmatprep.subr.mxu0 0.0
    %v2150 = vand.u32 %v1826, 4294901760
    %v2151 = vsub.f32 %v1826, %v2150
    %2152 = vmatpush1.msra.mxu0 %v2151
    %2153 = vmatprep.subr.mxu0 0.0
    %2154 = vmatpush2.msra.mxu0 0.0
    %2155 = vmatprep.subr.mxu0 0.0
    %2156 = vmatpush2.msra.mxu0 0.0
    %2157 = vmatprep.subr.mxu0 0.0
    %2158 = vmatpush2.msra.mxu0 0.0
    %2159 = vmatprep.subr.mxu0 0.0
    %2160 = vmatpush2.msra.mxu0 0.0
    %2161 = vmatprep.subr.mxu0 0.0
    %2162 = vmatpush2.msra.mxu0 0.0
    %2163 = vmatprep.subr.mxu0 0.0
    %2164 = vmatpush2.msra.mxu0 0.0
    %2165 = vmatprep.subr.mxu0 0.0
    %2166 = vmatpush2.msra.mxu0 0.0
    %2167 = vmatprep.subr.mxu0 0.0
    %2168 = vmatpush2.msra.mxu0 0.0
    %2169 = vmatprep.subr.mxu0 0.0
    %2170 = vmatpush2.msra.mxu0 0.0
    %2171 = vmatprep.subr.mxu0 0.0
    %2172 = vmatpush2.msra.mxu0 0.0
    %2173 = vmatprep.subr.mxu0 0.0
    %2174 = vmatpush2.msra.mxu0 0.0
    %2175 = vmatprep.subr.mxu0 0.0
    %2176 = vmatpush2.msra.mxu0 0.0
    %2177 = vmatprep.subr.mxu0 0.0
    %2178 = vmatpush2.msra.mxu0 0.0
    %2179 = vmatprep.subr.mxu0 0.0
    %2180 = vmatpush2.msra.mxu0 0.0
    %2181 = vmatprep.subr.mxu0 0.0
    %2182 = vmatpush2.msra.mxu0 0.0
    %2183 = vmatprep.subr.mxu0 0.0
    %2184 = vmatpush2.msra.mxu0 0.0
    %2185 = vmatprep.mubr.f32.mxu0 0.0
    %v2186 = vand.u32 %v1825, 4294901760
    %v2187 = vsub.f32 %v1825, %v2186
    %2188 = vmatmul.mubr.f32.gmra.mxu0 %v2187
    %v2189 = vpop.f32.mrf.mxu0
    %v2190 = vadd.f32 %v2086, %v2189
    %v2191 = vpop.f32.mrf.mxu0
    %2192 = vdwg.mxu0
    %2193 = vmatprep.subr.mxu0 0.0
    %v2194 = vand.u32 %v1841, 4294901760
    %2195 = vmatpush1.msra.mxu0 %v2194
    %2196 = vmatprep.subr.mxu0 0.0
    %v2197 = vand.u32 %v1840, 4294901760
    %2198 = vmatpush1.msra.mxu0 %v2197
    %2199 = vmatprep.subr.mxu0 0.0
    %v2200 = vand.u32 %v1839, 4294901760
    %2201 = vmatpush1.msra.mxu0 %v2200
    %2202 = vmatprep.subr.mxu0 0.0
    %v2203 = vand.u32 %v1838, 4294901760
    %2204 = vmatpush1.msra.mxu0 %v2203
    %2205 = vmatprep.subr.mxu0 0.0
    %v2206 = vand.u32 %v1837, 4294901760
    %2207 = vmatpush1.msra.mxu0 %v2206
    %2208 = vmatprep.subr.mxu0 0.0
    %v2209 = vand.u32 %v1836, 4294901760
    %2210 = vmatpush1.msra.mxu0 %v2209
    %2211 = vmatprep.subr.mxu0 0.0
    %v2212 = vand.u32 %v1835, 4294901760
    %2213 = vmatpush1.msra.mxu0 %v2212
    %2214 = vmatprep.subr.mxu0 0.0
    %v2215 = vand.u32 %v1834, 4294901760
    %2216 = vmatpush1.msra.mxu0 %v2215
    %2217 = vmatprep.subr.mxu0 0.0
    %v2218 = vand.u32 %v1833, 4294901760
    %2219 = vmatpush1.msra.mxu0 %v2218
    %2220 = vmatprep.subr.mxu0 0.0
    %v2221 = vand.u32 %v1832, 4294901760
    %2222 = vmatpush1.msra.mxu0 %v2221
    %2223 = vmatprep.subr.mxu0 0.0
    %v2224 = vand.u32 %v1831, 4294901760
    %2225 = vmatpush1.msra.mxu0 %v2224
    %2226 = vmatprep.subr.mxu0 0.0
    %v2227 = vand.u32 %v1830, 4294901760
    %2228 = vmatpush1.msra.mxu0 %v2227
    %2229 = vmatprep.subr.mxu0 0.0
    %v2230 = vand.u32 %v1829, 4294901760
    %2231 = vmatpush1.msra.mxu0 %v2230
    %2232 = vmatprep.subr.mxu0 0.0
    %v2233 = vand.u32 %v1828, 4294901760
    %2234 = vmatpush1.msra.mxu0 %v2233
    %2235 = vmatprep.subr.mxu0 0.0
    %v2236 = vand.u32 %v1827, 4294901760
    %2237 = vmatpush1.msra.mxu0 %v2236
    %2238 = vmatprep.subr.mxu0 0.0
    %v2239 = vand.u32 %v1826, 4294901760
    %2240 = vmatpush1.msra.mxu0 %v2239
    %2241 = vmatprep.subr.mxu0 0.0
    %2242 = vmatpush2.msra.mxu0 0.0
    %2243 = vmatprep.subr.mxu0 0.0
    %2244 = vmatpush2.msra.mxu0 0.0
    %2245 = vmatprep.subr.mxu0 0.0
    %2246 = vmatpush2.msra.mxu0 0.0
    %2247 = vmatprep.subr.mxu0 0.0
    %2248 = vmatpush2.msra.mxu0 0.0
    %2249 = vmatprep.subr.mxu0 0.0
    %2250 = vmatpush2.msra.mxu0 0.0
    %2251 = vmatprep.subr.mxu0 0.0
    %2252 = vmatpush2.msra.mxu0 0.0
    %2253 = vmatprep.subr.mxu0 0.0
    %2254 = vmatpush2.msra.mxu0 0.0
    %2255 = vmatprep.subr.mxu0 0.0
    %2256 = vmatpush2.msra.mxu0 0.0
    %2257 = vmatprep.subr.mxu0 0.0
    %2258 = vmatpush2.msra.mxu0 0.0
    %2259 = vmatprep.subr.mxu0 0.0
    %2260 = vmatpush2.msra.mxu0 0.0
    %2261 = vmatprep.subr.mxu0 0.0
    %2262 = vmatpush2.msra.mxu0 0.0
    %2263 = vmatprep.subr.mxu0 0.0
    %2264 = vmatpush2.msra.mxu0 0.0
    %2265 = vmatprep.subr.mxu0 0.0
    %2266 = vmatpush2.msra.mxu0 0.0
    %2267 = vmatprep.subr.mxu0 0.0
    %2268 = vmatpush2.msra.mxu0 0.0
    %2269 = vmatprep.subr.mxu0 0.0
    %2270 = vmatpush2.msra.mxu0 0.0
    %2271 = vmatprep.subr.mxu0 0.0
    %2272 = vmatpush2.msra.mxu0 0.0
    %2273 = vmatprep.mubr.f32.mxu0 0.0
    %v2274 = vand.u32 %v1825, 4294901760
    %v2275 = vsub.f32 %v1825, %v2274
    %v2276 = vand.u32 %v2275, 4294901760
    %2277 = vmatmul.mubr.f32.gmra.mxu0 %v2276
    %v2278 = vpop.f32.mrf.mxu0
    %v2279 = vadd.f32 %v2190, %v2278
    %v2280 = vpop.f32.mrf.mxu0
    %2281 = vdwg.mxu0
    %2282 = vmatprep.subr.mxu0 0.0
    %v2283 = vand.u32 %v1841, 4294901760
    %v2284 = vsub.f32 %v1841, %v2283
    %v2285 = vand.u32 %v2284, 4294901760
    %2286 = vmatpush1.msra.mxu0 %v2285
    %2287 = vmatprep.subr.mxu0 0.0
    %v2288 = vand.u32 %v1840, 4294901760
    %v2289 = vsub.f32 %v1840, %v2288
    %v2290 = vand.u32 %v2289, 4294901760
    %2291 = vmatpush1.msra.mxu0 %v2290
    %2292 = vmatprep.subr.mxu0 0.0
    %v2293 = vand.u32 %v1839, 4294901760
    %v2294 = vsub.f32 %v1839, %v2293
    %v2295 = vand.u32 %v2294, 4294901760
    %2296 = vmatpush1.msra.mxu0 %v2295
    %2297 = vmatprep.subr.mxu0 0.0
    %v2298 = vand.u32 %v1838, 4294901760
    %v2299 = vsub.f32 %v1838, %v2298
    %v2300 = vand.u32 %v2299, 4294901760
    %2301 = vmatpush1.msra.mxu0 %v2300
    %2302 = vmatprep.subr.mxu0 0.0
    %v2303 = vand.u32 %v1837, 4294901760
    %v2304 = vsub.f32 %v1837, %v2303
    %v2305 = vand.u32 %v2304, 4294901760
    %2306 = vmatpush1.msra.mxu0 %v2305
    %2307 = vmatprep.subr.mxu0 0.0
    %v2308 = vand.u32 %v1836, 4294901760
    %v2309 = vsub.f32 %v1836, %v2308
    %v2310 = vand.u32 %v2309, 4294901760
    %2311 = vmatpush1.msra.mxu0 %v2310
    %2312 = vmatprep.subr.mxu0 0.0
    %v2313 = vand.u32 %v1835, 4294901760
    %v2314 = vsub.f32 %v1835, %v2313
    %v2315 = vand.u32 %v2314, 4294901760
    %2316 = vmatpush1.msra.mxu0 %v2315
    %2317 = vmatprep.subr.mxu0 0.0
    %v2318 = vand.u32 %v1834, 4294901760
    %v2319 = vsub.f32 %v1834, %v2318
    %v2320 = vand.u32 %v2319, 4294901760
    %2321 = vmatpush1.msra.mxu0 %v2320
    %2322 = vmatprep.subr.mxu0 0.0
    %v2323 = vand.u32 %v1833, 4294901760
    %v2324 = vsub.f32 %v1833, %v2323
    %v2325 = vand.u32 %v2324, 4294901760
    %2326 = vmatpush1.msra.mxu0 %v2325
    %2327 = vmatprep.subr.mxu0 0.0
    %v2328 = vand.u32 %v1832, 4294901760
    %v2329 = vsub.f32 %v1832, %v2328
    %v2330 = vand.u32 %v2329, 4294901760
    %2331 = vmatpush1.msra.mxu0 %v2330
    %2332 = vmatprep.subr.mxu0 0.0
    %v2333 = vand.u32 %v1831, 4294901760
    %v2334 = vsub.f32 %v1831, %v2333
    %v2335 = vand.u32 %v2334, 4294901760
    %2336 = vmatpush1.msra.mxu0 %v2335
    %2337 = vmatprep.subr.mxu0 0.0
    %v2338 = vand.u32 %v1830, 4294901760
    %v2339 = vsub.f32 %v1830, %v2338
    %v2340 = vand.u32 %v2339, 4294901760
    %2341 = vmatpush1.msra.mxu0 %v2340
    %2342 = vmatprep.subr.mxu0 0.0
    %v2343 = vand.u32 %v1829, 4294901760
    %v2344 = vsub.f32 %v1829, %v2343
    %v2345 = vand.u32 %v2344, 4294901760
    %2346 = vmatpush1.msra.mxu0 %v2345
    %2347 = vmatprep.subr.mxu0 0.0
    %v2348 = vand.u32 %v1828, 4294901760
    %v2349 = vsub.f32 %v1828, %v2348
    %v2350 = vand.u32 %v2349, 4294901760
    %2351 = vmatpush1.msra.mxu0 %v2350
    %2352 = vmatprep.subr.mxu0 0.0
    %v2353 = vand.u32 %v1827, 4294901760
    %v2354 = vsub.f32 %v1827, %v2353
    %v2355 = vand.u32 %v2354, 4294901760
    %2356 = vmatpush1.msra.mxu0 %v2355
    %2357 = vmatprep.subr.mxu0 0.0
    %v2358 = vand.u32 %v1826, 4294901760
    %v2359 = vsub.f32 %v1826, %v2358
    %v2360 = vand.u32 %v2359, 4294901760
    %2361 = vmatpush1.msra.mxu0 %v2360
    %2362 = vmatprep.subr.mxu0 0.0
    %2363 = vmatpush2.msra.mxu0 0.0
    %2364 = vmatprep.subr.mxu0 0.0
    %2365 = vmatpush2.msra.mxu0 0.0
    %2366 = vmatprep.subr.mxu0 0.0
    %2367 = vmatpush2.msra.mxu0 0.0
    %2368 = vmatprep.subr.mxu0 0.0
    %2369 = vmatpush2.msra.mxu0 0.0
    %2370 = vmatprep.subr.mxu0 0.0
    %2371 = vmatpush2.msra.mxu0 0.0
    %2372 = vmatprep.subr.mxu0 0.0
    %2373 = vmatpush2.msra.mxu0 0.0
    %2374 = vmatprep.subr.mxu0 0.0
    %2375 = vmatpush2.msra.mxu0 0.0
    %2376 = vmatprep.subr.mxu0 0.0
    %2377 = vmatpush2.msra.mxu0 0.0
    %2378 = vmatprep.subr.mxu0 0.0
    %2379 = vmatpush2.msra.mxu0 0.0
    %2380 = vmatprep.subr.mxu0 0.0
    %2381 = vmatpush2.msra.mxu0 0.0
    %2382 = vmatprep.subr.mxu0 0.0
    %2383 = vmatpush2.msra.mxu0 0.0
    %2384 = vmatprep.subr.mxu0 0.0
    %2385 = vmatpush2.msra.mxu0 0.0
    %2386 = vmatprep.subr.mxu0 0.0
    %2387 = vmatpush2.msra.mxu0 0.0
    %2388 = vmatprep.subr.mxu0 0.0
    %2389 = vmatpush2.msra.mxu0 0.0
    %2390 = vmatprep.subr.mxu0 0.0
    %2391 = vmatpush2.msra.mxu0 0.0
    %2392 = vmatprep.subr.mxu0 0.0
    %2393 = vmatpush2.msra.mxu0 0.0
    %2394 = vmatprep.mubr.f32.mxu0 0.0
    %v2395 = vand.u32 %v1825, 4294901760
    %2396 = vmatmul.mubr.f32.gmra.mxu0 %v2395
    %v2397 = vpop.f32.mrf.mxu0
    %v2398 = vadd.f32 %v2279, %v2397
    %v2399 = vpop.f32.mrf.mxu0
    %2400 = vdwg.mxu0
    %2401 = vmatprep.subr.mxu0 0.0
    %v2402 = vand.u32 %v1841, 4294901760
    %2403 = vmatpush1.msra.mxu0 %v2402
    %2404 = vmatprep.subr.mxu0 0.0
    %v2405 = vand.u32 %v1840, 4294901760
    %2406 = vmatpush1.msra.mxu0 %v2405
    %2407 = vmatprep.subr.mxu0 0.0
    %v2408 = vand.u32 %v1839, 4294901760
    %2409 = vmatpush1.msra.mxu0 %v2408
    %2410 = vmatprep.subr.mxu0 0.0
    %v2411 = vand.u32 %v1838, 4294901760
    %2412 = vmatpush1.msra.mxu0 %v2411
    %2413 = vmatprep.subr.mxu0 0.0
    %v2414 = vand.u32 %v1837, 4294901760
    %2415 = vmatpush1.msra.mxu0 %v2414
    %2416 = vmatprep.subr.mxu0 0.0
    %v2417 = vand.u32 %v1836, 4294901760
    %2418 = vmatpush1.msra.mxu0 %v2417
    %2419 = vmatprep.subr.mxu0 0.0
    %v2420 = vand.u32 %v1835, 4294901760
    %2421 = vmatpush1.msra.mxu0 %v2420
    %2422 = vmatprep.subr.mxu0 0.0
    %v2423 = vand.u32 %v1834, 4294901760
    %2424 = vmatpush1.msra.mxu0 %v2423
    %2425 = vmatprep.subr.mxu0 0.0
    %v2426 = vand.u32 %v1833, 4294901760
    %2427 = vmatpush1.msra.mxu0 %v2426
    %2428 = vmatprep.subr.mxu0 0.0
    %v2429 = vand.u32 %v1832, 4294901760
    %2430 = vmatpush1.msra.mxu0 %v2429
    %2431 = vmatprep.subr.mxu0 0.0
    %v2432 = vand.u32 %v1831, 4294901760
    %2433 = vmatpush1.msra.mxu0 %v2432
    %2434 = vmatprep.subr.mxu0 0.0
    %v2435 = vand.u32 %v1830, 4294901760
    %2436 = vmatpush1.msra.mxu0 %v2435
    %2437 = vmatprep.subr.mxu0 0.0
    %v2438 = vand.u32 %v1829, 4294901760
    %2439 = vmatpush1.msra.mxu0 %v2438
    %2440 = vmatprep.subr.mxu0 0.0
    %v2441 = vand.u32 %v1828, 4294901760
    %2442 = vmatpush1.msra.mxu0 %v2441
    %2443 = vmatprep.subr.mxu0 0.0
    %v2444 = vand.u32 %v1827, 4294901760
    %2445 = vmatpush1.msra.mxu0 %v2444
    %2446 = vmatprep.subr.mxu0 0.0
    %v2447 = vand.u32 %v1826, 4294901760
    %2448 = vmatpush1.msra.mxu0 %v2447
    %2449 = vmatprep.subr.mxu0 0.0
    %2450 = vmatpush2.msra.mxu0 0.0
    %2451 = vmatprep.subr.mxu0 0.0
    %2452 = vmatpush2.msra.mxu0 0.0
    %2453 = vmatprep.subr.mxu0 0.0
    %2454 = vmatpush2.msra.mxu0 0.0
    %2455 = vmatprep.subr.mxu0 0.0
    %2456 = vmatpush2.msra.mxu0 0.0
    %2457 = vmatprep.subr.mxu0 0.0
    %2458 = vmatpush2.msra.mxu0 0.0
    %2459 = vmatprep.subr.mxu0 0.0
    %2460 = vmatpush2.msra.mxu0 0.0
    %2461 = vmatprep.subr.mxu0 0.0
    %2462 = vmatpush2.msra.mxu0 0.0
    %2463 = vmatprep.subr.mxu0 0.0
    %2464 = vmatpush2.msra.mxu0 0.0
    %2465 = vmatprep.subr.mxu0 0.0
    %2466 = vmatpush2.msra.mxu0 0.0
    %2467 = vmatprep.subr.mxu0 0.0
    %2468 = vmatpush2.msra.mxu0 0.0
    %2469 = vmatprep.subr.mxu0 0.0
    %2470 = vmatpush2.msra.mxu0 0.0
    %2471 = vmatprep.subr.mxu0 0.0
    %2472 = vmatpush2.msra.mxu0 0.0
    %2473 = vmatprep.subr.mxu0 0.0
    %2474 = vmatpush2.msra.mxu0 0.0
    %2475 = vmatprep.subr.mxu0 0.0
    %2476 = vmatpush2.msra.mxu0 0.0
    %2477 = vmatprep.subr.mxu0 0.0
    %2478 = vmatpush2.msra.mxu0 0.0
    %2479 = vmatprep.subr.mxu0 0.0
    %2480 = vmatpush2.msra.mxu0 0.0
    %2481 = vmatprep.mubr.f32.mxu0 0.0
    %v2482 = vand.u32 %v1825, 4294901760
    %2483 = vmatmul.mubr.f32.gmra.mxu0 %v2482
    %v2484 = vpop.f32.mrf.mxu0
    %v2485 = vadd.f32 %v2398, %v2484
    %v2486 = vpop.f32.mrf.mxu0
    %2487 = vdwg.mxu0
    %2488 = vst [vmem:[#allocation5] sm:$0xff] %v2485
    // Predicated region
    $region14: #{forward.1} parent=1 // pred_check
      _
    $region15: #{forward.1} parent=1 // pred_check_branch
      %2490 = sbr.rel (0) target = $region17
    $region16: #{forward.1} parent=1 // pred_region
      %s2492 = ssub.s32 128, 128
      %2493 = vsyncadd [#allocation4], %s2492
      %s2495 = sshll.u32 [#allocation5], 4
      %s2496 = int_to_ptr.vmem [resolvable:$true] %s2495
      %2498 = dma.vmem_to_hbm [thread:$0]  %s2496, 128, %s2, [#allocation4]
    $region17: #{forward.1} parent=1 // pred_fallthru
      _
    // Predicated region
    $region18: #{forward.1} parent=1 // pred_check
      _
    $region19: #{forward.1} parent=1 // pred_check_branch
      %2500 = sbr.rel (0) target = $region21
    $region20: #{forward.1} parent=1 // pred_region
      %2501 = dma.done [#allocation4], 128
    $region21: #{forward.1} parent=1 // pred_fallthru
      _
    %2502 = vsyncpa [#allocation3], 1
    %2503 = vsyncpa [#allocation4], 1

</llo_original>
